<compile_context>
chip_gen: v7x
topology: tpu7x:2x2x1
jax: 0.10.0
libtpu: 0.0.40
codegen_flags: <defaults>
</compile_context>

<pallas_src>
import functools

import jax
import jax.numpy as jnp
from jax import lax
from jax.experimental import pallas as pl
from jax.experimental.pallas import tpu as pltpu


def tradition_mha_relative(query, key, value, mask, params, *,
                           num_heads, max_relative_position):
    """query (B,T,E), key/value (B,S,E), mask (num_heads, S) with 0 = masked key."""
    B, T, E = query.shape
    S = key.shape[1]
    H = num_heads
    hd = E // H
    assert hd * H == E, "embed_dim must be divisible by num_heads"
    # The module's mask.unsqueeze(1) broadcast aligns the mask's dim-0 with the
    # head axis of the (bsz, num_heads, T, S) logits (requires bsz == num_heads).
    assert mask.shape[0] == H, "mask dim 0 must equal num_heads (module broadcast)"
    scaling = hd ** -0.5
    R = max_relative_position
    num_emb = 2 * R + 1
    bf16 = jnp.bfloat16

    in_w = params["in_proj_weight"]            # (3E, E)
    in_b = params["in_proj_bias"]              # (3E,)
    wq, wk, wv = in_w[:E], in_w[E:2 * E], in_w[2 * E:]
    bq, bk, bv = in_b[:E], in_b[E:2 * E], in_b[2 * E:]

    # ---- full-width QKV in-projections (single fat MXU matmuls, outside kernel) ----
    q = (jnp.einsum("bte,fe->btf", query, wq) + bq) * scaling
    k = jnp.einsum("bse,fe->bsf", key, wk) + bk
    v = jnp.einsum("bse,fe->bsf", value, wv) + bv
    # NOTE: no (B,T,H,hd)->(B,H,T,hd) transposes — heads are sliced in-kernel.

    # additive key-padding bias per head: 0 = keep, -1e30 = masked
    mask_bias = jnp.where(mask == 0, -1e30, 0.0).astype(jnp.float32)        # (H, S)

    ekt = params["rel_keys_embedding"].T.astype(bf16)        # (hd, 2R+1)
    ev = params["rel_values_embedding"].astype(bf16)         # (2R+1, hd)

    def kernel(q_ref, k_ref, v_ref, mb_ref, ekt_ref, ev_ref, out_ref):
        qb = q_ref[0]                       # (T, E) bf16 (pre-scaled)
        kb = k_ref[0]                       # (S, E) bf16
        vb = v_ref[0]                       # (S, E) bf16
        mb = mb_ref[...]                    # (H, S) f32 additive bias
        ekt_t = ekt_ref[...]                # (hd, 2R+1) bf16
        ev_t = ev_ref[...]                  # (2R+1, hd) bf16

        # relative-distance bucket matrix, rebuilt in-kernel (no HBM / VMEM residency)
        row = lax.broadcasted_iota(jnp.int32, (T, S), 0)
        col = lax.broadcasted_iota(jnp.int32, (T, S), 1)
        dist = jnp.clip(col - row - (S - T), -R, R) + R      # (T, S) in [0, 2R]

        outs = []
        for h in range(H):                                   # static unroll over heads
            q_h = qb[:, h * hd:(h + 1) * hd]                 # (T, hd)
            k_h = kb[:, h * hd:(h + 1) * hd]                 # (S, hd)
            v_h = vb[:, h * hd:(h + 1) * hd]                 # (S, hd)
            bias_h = mb[h:h + 1, :]                          # (1, S)

            # content logits on the MXU, f32 accumulation
            logits = lax.dot_general(q_h, k_h, (((1,), (1,)), ((), ())),
                                     preferred_element_type=jnp.float32)     # (T, S)

            # rel-key logits: tiny MXU matmul then distance-bucket expansion
            qe = jnp.dot(q_h, ekt_t, preferred_element_type=jnp.float32)     # (T, 2R+1)
            relb = jnp.zeros((T, S), jnp.float32)
            # TODO(synk): for large R replace this per-bucket select with the
            # Transformer-XL skew remap (one (T, T+S-1) matmul + shift).
            for r in range(num_emb):
                relb = jnp.where(dist == r, qe[:, r:r + 1], relb)

            logits = logits + relb + bias_h

            # softmax; masked logits sit at ~-1e30 so exp underflows to exactly 0
            m = jnp.max(logits, axis=-1, keepdims=True)
            e = jnp.exp(logits - m)
            denom = jnp.sum(e, axis=-1, keepdims=True)
            p = e * pl.reciprocal(denom, approx=True)                         # (T, S) f32
            # post-softmax masked_fill(0.0): also makes fully-masked rows exactly 0
            p = p * jnp.where(bias_h == 0.0, 1.0, 0.0)

            # content P @ V on the MXU
            attn = jnp.dot(p.astype(vb.dtype), v_h,
                           preferred_element_type=jnp.float32)                # (T, hd)

            # rel-value term: per-bucket sums -> ONE small MXU matmul W @ E_v
            # TODO(synk): for large R build W in O(T*S) via diagonal extracts
            # (interior buckets) + prefix/suffix sums (edge buckets).
            wcols = [jnp.sum(jnp.where(dist == r, p, 0.0), axis=-1, keepdims=True)
                     for r in range(num_emb)]
            w = jnp.concatenate(wcols, axis=-1)                               # (T, 2R+1)
            attn = attn + jnp.dot(w.astype(ev_t.dtype), ev_t,
                                  preferred_element_type=jnp.float32)

            outs.append(attn)

        # single lane-dense (T, E) store of the head-concatenated result
        out_ref[0] = jnp.concatenate(outs, axis=-1).astype(out_ref.dtype)

    # TODO(synk): for long sequences (v7x 64 MiB VMEM) add a KV grid axis with
    # flash-style online softmax; at these block sizes everything fits easily.
    attn_heads = pl.pallas_call(
        kernel,
        out_shape=jax.ShapeDtypeStruct((B, T, E), bf16),
        grid_spec=pltpu.PrefetchScalarGridSpec(
            num_scalar_prefetch=0,
            grid=(B,),
            in_specs=[
                pl.BlockSpec((1, T, E), lambda b: (b, 0, 0)),      # q (packed heads)
                pl.BlockSpec((1, S, E), lambda b: (b, 0, 0)),      # k
                pl.BlockSpec((1, S, E), lambda b: (b, 0, 0)),      # v
                pl.BlockSpec((H, S), lambda b: (0, 0)),            # additive mask bias
                pl.BlockSpec((hd, num_emb), lambda b: (0, 0)),     # E_k^T
                pl.BlockSpec((num_emb, hd), lambda b: (0, 0)),     # E_v
            ],
            out_specs=pl.BlockSpec((1, T, E), lambda b: (b, 0, 0)),
        ),
        compiler_params=pltpu.CompilerParams(
            dimension_semantics=("parallel",)),
    )(q.astype(bf16), k.astype(bf16), v.astype(bf16), mask_bias, ekt, ev)

    # ---- single full-width output projection ----
    out = (jnp.einsum("bte,fe->btf", attn_heads.astype(jnp.float32),
                      params["out_proj_weight"])
           + params["out_proj_bias"])
    return out
    # TODO(synk): dropout with p > 0 (training mode) would need pltpu.prng_* in-kernel.


def reference(query, key, value, mask, params, *, num_heads, max_relative_position):
    """Pure-JAX transcription of the PyTorch forward (for verification)."""
    B, T, E = query.shape
    S = key.shape[1]
    H = num_heads
    hd = E // H
    scaling = hd ** -0.5
    hp = jax.lax.Precision.HIGHEST

    in_w = params["in_proj_weight"]
    in_b = params["in_proj_bias"]
    wq, wk, wv = in_w[:E], in_w[E:2 * E], in_w[2 * E:]
    bq, bk, bv = in_b[:E], in_b[E:2 * E], in_b[2 * E:]

    q = jnp.einsum("bte,fe->btf", query, wq, precision=hp) + bq
    k = jnp.einsum("bse,fe->bsf", key, wk, precision=hp) + bk
    v = jnp.einsum("bse,fe->bsf", value, wv, precision=hp) + bv
    q = q * scaling
    q = q.reshape(B, T, H, hd).transpose(0, 2, 1, 3)
    k = k.reshape(B, S, H, hd).transpose(0, 2, 1, 3)
    v = v.reshape(B, S, H, hd).transpose(0, 2, 1, 3)

    r = jnp.arange(S)
    dist = jnp.clip(r[None, :] - r[:, None],
                    -max_relative_position, max_relative_position) + max_relative_position
    rel_k = jnp.take(params["rel_keys_embedding"], dist, axis=0)[-T:]
    rel_v = jnp.take(params["rel_values_embedding"], dist, axis=0)[-T:]

    logits = jnp.einsum("bhtd,bhsd->bhts", q, k, precision=hp)
    logits = logits + jnp.einsum("bhtd,tsd->bhts", q, rel_k, precision=hp)

    masked = jnp.broadcast_to(mask[None, :, None, :] == 0, logits.shape)
    neg = jnp.finfo(jnp.float32).min
    logits = jnp.where(masked, neg, logits)
    p = jax.nn.softmax(logits, axis=-1)
    p = jnp.where(masked, 0.0, p)

    attn = jnp.einsum("bhts,bhsd->bhtd", p, v, precision=hp)
    attn = attn + jnp.einsum("bhts,tsd->bhtd", p, rel_v, precision=hp)
    attn = attn.transpose(0, 2, 1, 3).reshape(B, T, E)
    out = jnp.einsum("bte,fe->btf", attn, params["out_proj_weight"],
                     precision=hp) + params["out_proj_bias"]
    return out


if __name__ == "__main__":
    # bsz == num_heads so the module's mask broadcast (unsqueeze(1) against the
    # (bsz, num_heads, T, S) view) is well-formed, as in the original code.
    B, T, S, E, H = 4, 8, 8, 32, 4
    hd = E // H
    max_rel = 4
    num_emb = 2 * max_rel + 1

    def xavier_uniform(k, shape):
        fan_out, fan_in = shape[0], shape[1]
        bound = (6.0 / (fan_in + fan_out)) ** 0.5
        return jax.random.uniform(k, shape, jnp.float32, -bound, bound)

    ks = jax.random.split(jax.random.PRNGKey(0), 8)
    params = {
        "in_proj_weight": xavier_uniform(ks[0], (3 * E, E)),
        "in_proj_bias": jnp.zeros((3 * E,), jnp.float32),
        "out_proj_weight": xavier_uniform(ks[1], (E, E)),
        "out_proj_bias": jnp.zeros((E,), jnp.float32),
        "rel_keys_embedding": xavier_uniform(ks[2], (num_emb, hd)),
        "rel_values_embedding": xavier_uniform(ks[3], (num_emb, hd)),
    }

    query = jax.random.normal(ks[4], (B, T, E), jnp.float32)
    key_in = jax.random.normal(ks[5], (B, S, E), jnp.float32)
    value = jax.random.normal(ks[6], (B, S, E), jnp.float32)
    # mask: 1 = keep, 0 = masked key; shape (num_heads, S) per module semantics
    mask = (jax.random.uniform(ks[7], (H, S)) > 0.2).astype(jnp.int32)
    mask = mask.at[:, 0].set(1)

    fn = jax.jit(functools.partial(tradition_mha_relative,
                                   num_heads=H, max_relative_position=max_rel))
    out = fn(query, key_in, value, mask, params)
    out = jax.block_until_ready(out)

    ref = reference(query, key_in, value, mask, params,
                    num_heads=H, max_relative_position=max_rel)
    assert out.shape == (B, T, E)
    # bf16 MXU operands + bf16 kernel output + approx reciprocal vs. a
    # HIGHEST-precision f32 reference
    if not jnp.allclose(out, ref, atol=4e-2, rtol=4e-2):
        raise SystemExit("mismatch: max abs err = %e"
                         % float(jnp.max(jnp.abs(out - ref))))
    print("KERNEL_OK")
</pallas_src>

<mosaic_0001>
module attributes {stable_mosaic.version = 11 : i64} {
  func.func @kernel(%arg0: i32, %arg1: memref<1x8x32xbf16, #tpu.memory_space<vmem>>, %arg2: memref<1x8x32xbf16, #tpu.memory_space<vmem>>, %arg3: memref<1x8x32xbf16, #tpu.memory_space<vmem>>, %arg4: memref<4x8xf32, #tpu.memory_space<vmem>>, %arg5: memref<8x9xbf16, #tpu.memory_space<vmem>>, %arg6: memref<9x8xbf16, #tpu.memory_space<vmem>>, %arg7: memref<1x8x32xbf16, #tpu.memory_space<vmem>>) attributes {dimension_semantics = [#tpu.dimension_semantics<parallel>], iteration_bounds = array<i64: 4>, scalar_prefetch = 0 : i64, scratch_operands = 0 : i64, tpu.core_type = #tpu.core_type<tc>, window_params = [{transform_indices = @transform_0, window_bounds = array<i64: 1, 8, 32>}, {transform_indices = @transform_1, window_bounds = array<i64: 1, 8, 32>}, {transform_indices = @transform_2, window_bounds = array<i64: 1, 8, 32>}, {pipeline_mode = #tpu.pipeline_mode<synchronous>, transform_indices = @transform_3, window_bounds = array<i64: 4, 8>}, {pipeline_mode = #tpu.pipeline_mode<synchronous>, transform_indices = @transform_4, window_bounds = array<i64: 8, 9>}, {pipeline_mode = #tpu.pipeline_mode<synchronous>, transform_indices = @transform_5, window_bounds = array<i64: 9, 8>}, {transform_indices = @transform_6, window_bounds = array<i64: 1, 8, 32>}]} {
    %c0 = arith.constant 0 : index
    %c0_0 = arith.constant 0 : index
    %c0_1 = arith.constant 0 : index
    %0 = vector.load %arg1[%c0, %c0_0, %c0_1] : memref<1x8x32xbf16, #tpu.memory_space<vmem>>, vector<1x8x32xbf16>
    %1 = vector.shape_cast %0 : vector<1x8x32xbf16> to vector<8x32xbf16>
    %c0_2 = arith.constant 0 : index
    %c0_3 = arith.constant 0 : index
    %c0_4 = arith.constant 0 : index
    %2 = vector.load %arg2[%c0_2, %c0_3, %c0_4] : memref<1x8x32xbf16, #tpu.memory_space<vmem>>, vector<1x8x32xbf16>
    %3 = vector.shape_cast %2 : vector<1x8x32xbf16> to vector<8x32xbf16>
    %c0_5 = arith.constant 0 : index
    %c0_6 = arith.constant 0 : index
    %c0_7 = arith.constant 0 : index
    %4 = vector.load %arg3[%c0_5, %c0_6, %c0_7] : memref<1x8x32xbf16, #tpu.memory_space<vmem>>, vector<1x8x32xbf16>
    %5 = vector.shape_cast %4 : vector<1x8x32xbf16> to vector<8x32xbf16>
    %c0_8 = arith.constant 0 : index
    %c0_9 = arith.constant 0 : index
    %6 = vector.load %arg4[%c0_8, %c0_9] : memref<4x8xf32, #tpu.memory_space<vmem>>, vector<4x8xf32>
    %c0_10 = arith.constant 0 : index
    %c0_11 = arith.constant 0 : index
    %7 = vector.load %arg5[%c0_10, %c0_11] : memref<8x9xbf16, #tpu.memory_space<vmem>>, vector<8x9xbf16>
    %c0_12 = arith.constant 0 : index
    %c0_13 = arith.constant 0 : index
    %8 = vector.load %arg6[%c0_12, %c0_13] : memref<9x8xbf16, #tpu.memory_space<vmem>>, vector<9x8xbf16>
    %9 = tpu.iota {dimensions = array<i32: 0>} : vector<8x8xi32>
    %10 = tpu.iota {dimensions = array<i32: 1>} : vector<8x8xi32>
    %11 = arith.subi %10, %9 : vector<8x8xi32>
    %c0_i32 = arith.constant 0 : i32
    %12 = vector.broadcast %c0_i32 : i32 to vector<8x8xi32>
    %13 = arith.subi %11, %12 : vector<8x8xi32>
    %c-4_i32 = arith.constant -4 : i32
    %c4_i32 = arith.constant 4 : i32
    %14 = vector.broadcast %c-4_i32 : i32 to vector<8x8xi32>
    %15 = arith.maxsi %14, %13 : vector<8x8xi32>
    %16 = vector.broadcast %c4_i32 : i32 to vector<8x8xi32>
    %17 = arith.minsi %16, %15 : vector<8x8xi32>
    %c4_i32_14 = arith.constant 4 : i32
    %18 = vector.broadcast %c4_i32_14 : i32 to vector<8x8xi32>
    %19 = arith.addi %17, %18 : vector<8x8xi32>
    %20 = vector.extract_strided_slice %1 {offsets = [0, 0], sizes = [8, 8], strides = [1, 1]} : vector<8x32xbf16> to vector<8x8xbf16>
    %21 = vector.extract_strided_slice %3 {offsets = [0, 0], sizes = [8, 8], strides = [1, 1]} : vector<8x32xbf16> to vector<8x8xbf16>
    %22 = vector.extract_strided_slice %5 {offsets = [0, 0], sizes = [8, 8], strides = [1, 1]} : vector<8x32xbf16> to vector<8x8xbf16>
    %23 = vector.extract_strided_slice %6 {offsets = [0, 0], sizes = [1, 8], strides = [1, 1]} : vector<4x8xf32> to vector<1x8xf32>
    %cst = arith.constant dense<0.000000e+00> : vector<8x8xf32>
    %24 = tpu.matmul %20, %21, %cst {dimension_numbers = #tpu.dot_dimension_numbers<[1], [1], [0], [0], [0, 0, 1, 0], [], []>} : vector<8x8xbf16>, vector<8x8xbf16>, vector<8x8xf32> -> vector<8x8xf32>
    %cst_15 = arith.constant dense<0.000000e+00> : vector<8x9xf32>
    %25 = tpu.matmul %20, %7, %cst_15 {dimension_numbers = #tpu.dot_dimension_numbers<[1], [0], [0], [1], [0, 0, 1, 1], [], []>} : vector<8x8xbf16>, vector<8x9xbf16>, vector<8x9xf32> -> vector<8x9xf32>
    %cst_16 = arith.constant 0.000000e+00 : f32
    %26 = vector.broadcast %cst_16 : f32 to vector<8x8xf32>
    %c0_i32_17 = arith.constant 0 : i32
    %27 = vector.broadcast %c0_i32_17 : i32 to vector<8x8xi32>
    %28 = arith.cmpi eq, %19, %27 : vector<8x8xi32>
    %29 = vector.extract_strided_slice %25 {offsets = [0, 0], sizes = [8, 1], strides = [1, 1]} : vector<8x9xf32> to vector<8x1xf32>
    %30 = vector.shape_cast %29 : vector<8x1xf32> to vector<8x1xf32>
    %31 = vector.broadcast %30 : vector<8x1xf32> to vector<8x8xf32>
    %32 = arith.select %28, %31, %26 : vector<8x8xi1>, vector<8x8xf32>
    %c1_i32 = arith.constant 1 : i32
    %33 = vector.broadcast %c1_i32 : i32 to vector<8x8xi32>
    %34 = arith.cmpi eq, %19, %33 : vector<8x8xi32>
    %35 = vector.extract_strided_slice %25 {offsets = [0, 1], sizes = [8, 1], strides = [1, 1]} : vector<8x9xf32> to vector<8x1xf32>
    %36 = vector.shape_cast %35 : vector<8x1xf32> to vector<8x1xf32>
    %37 = vector.broadcast %36 : vector<8x1xf32> to vector<8x8xf32>
    %38 = arith.select %34, %37, %32 : vector<8x8xi1>, vector<8x8xf32>
    %c2_i32 = arith.constant 2 : i32
    %39 = vector.broadcast %c2_i32 : i32 to vector<8x8xi32>
    %40 = arith.cmpi eq, %19, %39 : vector<8x8xi32>
    %41 = vector.extract_strided_slice %25 {offsets = [0, 2], sizes = [8, 1], strides = [1, 1]} : vector<8x9xf32> to vector<8x1xf32>
    %42 = vector.shape_cast %41 : vector<8x1xf32> to vector<8x1xf32>
    %43 = vector.broadcast %42 : vector<8x1xf32> to vector<8x8xf32>
    %44 = arith.select %40, %43, %38 : vector<8x8xi1>, vector<8x8xf32>
    %c3_i32 = arith.constant 3 : i32
    %45 = vector.broadcast %c3_i32 : i32 to vector<8x8xi32>
    %46 = arith.cmpi eq, %19, %45 : vector<8x8xi32>
    %47 = vector.extract_strided_slice %25 {offsets = [0, 3], sizes = [8, 1], strides = [1, 1]} : vector<8x9xf32> to vector<8x1xf32>
    %48 = vector.shape_cast %47 : vector<8x1xf32> to vector<8x1xf32>
    %49 = vector.broadcast %48 : vector<8x1xf32> to vector<8x8xf32>
    %50 = arith.select %46, %49, %44 : vector<8x8xi1>, vector<8x8xf32>
    %c4_i32_18 = arith.constant 4 : i32
    %51 = vector.broadcast %c4_i32_18 : i32 to vector<8x8xi32>
    %52 = arith.cmpi eq, %19, %51 : vector<8x8xi32>
    %53 = vector.extract_strided_slice %25 {offsets = [0, 4], sizes = [8, 1], strides = [1, 1]} : vector<8x9xf32> to vector<8x1xf32>
    %54 = vector.shape_cast %53 : vector<8x1xf32> to vector<8x1xf32>
    %55 = vector.broadcast %54 : vector<8x1xf32> to vector<8x8xf32>
    %56 = arith.select %52, %55, %50 : vector<8x8xi1>, vector<8x8xf32>
    %c5_i32 = arith.constant 5 : i32
    %57 = vector.broadcast %c5_i32 : i32 to vector<8x8xi32>
    %58 = arith.cmpi eq, %19, %57 : vector<8x8xi32>
    %59 = vector.extract_strided_slice %25 {offsets = [0, 5], sizes = [8, 1], strides = [1, 1]} : vector<8x9xf32> to vector<8x1xf32>
    %60 = vector.shape_cast %59 : vector<8x1xf32> to vector<8x1xf32>
    %61 = vector.broadcast %60 : vector<8x1xf32> to vector<8x8xf32>
    %62 = arith.select %58, %61, %56 : vector<8x8xi1>, vector<8x8xf32>
    %c6_i32 = arith.constant 6 : i32
    %63 = vector.broadcast %c6_i32 : i32 to vector<8x8xi32>
    %64 = arith.cmpi eq, %19, %63 : vector<8x8xi32>
    %65 = vector.extract_strided_slice %25 {offsets = [0, 6], sizes = [8, 1], strides = [1, 1]} : vector<8x9xf32> to vector<8x1xf32>
    %66 = vector.shape_cast %65 : vector<8x1xf32> to vector<8x1xf32>
    %67 = vector.broadcast %66 : vector<8x1xf32> to vector<8x8xf32>
    %68 = arith.select %64, %67, %62 : vector<8x8xi1>, vector<8x8xf32>
    %c7_i32 = arith.constant 7 : i32
    %69 = vector.broadcast %c7_i32 : i32 to vector<8x8xi32>
    %70 = arith.cmpi eq, %19, %69 : vector<8x8xi32>
    %71 = vector.extract_strided_slice %25 {offsets = [0, 7], sizes = [8, 1], strides = [1, 1]} : vector<8x9xf32> to vector<8x1xf32>
    %72 = vector.shape_cast %71 : vector<8x1xf32> to vector<8x1xf32>
    %73 = vector.broadcast %72 : vector<8x1xf32> to vector<8x8xf32>
    %74 = arith.select %70, %73, %68 : vector<8x8xi1>, vector<8x8xf32>
    %c8_i32 = arith.constant 8 : i32
    %75 = vector.broadcast %c8_i32 : i32 to vector<8x8xi32>
    %76 = arith.cmpi eq, %19, %75 : vector<8x8xi32>
    %77 = vector.extract_strided_slice %25 {offsets = [0, 8], sizes = [8, 1], strides = [1, 1]} : vector<8x9xf32> to vector<8x1xf32>
    %78 = vector.shape_cast %77 : vector<8x1xf32> to vector<8x1xf32>
    %79 = vector.broadcast %78 : vector<8x1xf32> to vector<8x8xf32>
    %80 = arith.select %76, %79, %74 : vector<8x8xi1>, vector<8x8xf32>
    %81 = arith.addf %24, %80 : vector<8x8xf32>
    %82 = vector.broadcast %23 : vector<1x8xf32> to vector<8x8xf32>
    %83 = arith.addf %81, %82 : vector<8x8xf32>
    %cst_19 = arith.constant dense<0xFF800000> : vector<8xf32>
    %84 = vector.multi_reduction <maximumf>, %83, %cst_19 [1] : vector<8x8xf32> to vector<8xf32>
    %85 = vector.shape_cast %84 : vector<8xf32> to vector<8x1xf32>
    %86 = vector.broadcast %85 : vector<8x1xf32> to vector<8x8xf32>
    %87 = arith.subf %83, %86 : vector<8x8xf32>
    %88 = math.exp %87 : vector<8x8xf32>
    %cst_20 = arith.constant dense<0.000000e+00> : vector<8xf32>
    %89 = vector.multi_reduction <add>, %88, %cst_20 [1] : vector<8x8xf32> to vector<8xf32>
    %90 = vector.shape_cast %89 : vector<8xf32> to vector<8x1xf32>
    %91 = tpu.reciprocal %90 {approx = true} : vector<8x1xf32> -> vector<8x1xf32>
    %92 = vector.broadcast %91 : vector<8x1xf32> to vector<8x8xf32>
    %93 = arith.mulf %88, %92 : vector<8x8xf32>
    %cst_21 = arith.constant 0.000000e+00 : f32
    %94 = vector.broadcast %cst_21 : f32 to vector<1x8xf32>
    %95 = arith.cmpf oeq, %23, %94 : vector<1x8xf32>
    %cst_22 = arith.constant 1.000000e+00 : f32
    %cst_23 = arith.constant 0.000000e+00 : f32
    %96 = vector.broadcast %cst_22 : f32 to vector<1x8xf32>
    %97 = vector.broadcast %cst_23 : f32 to vector<1x8xf32>
    %98 = arith.select %95, %96, %97 : vector<1x8xi1>, vector<1x8xf32>
    %99 = vector.broadcast %98 : vector<1x8xf32> to vector<8x8xf32>
    %100 = arith.mulf %93, %99 : vector<8x8xf32>
    %101 = arith.truncf %100 : vector<8x8xf32> to vector<8x8xbf16>
    %cst_24 = arith.constant dense<0.000000e+00> : vector<8x8xf32>
    %102 = tpu.matmul %101, %22, %cst_24 {dimension_numbers = #tpu.dot_dimension_numbers<[1], [0], [0], [1], [0, 0, 1, 1], [], []>} : vector<8x8xbf16>, vector<8x8xbf16>, vector<8x8xf32> -> vector<8x8xf32>
    %c0_i32_25 = arith.constant 0 : i32
    %103 = vector.broadcast %c0_i32_25 : i32 to vector<8x8xi32>
    %104 = arith.cmpi eq, %19, %103 : vector<8x8xi32>
    %cst_26 = arith.constant 0.000000e+00 : f32
    %105 = vector.broadcast %cst_26 : f32 to vector<8x8xf32>
    %106 = arith.select %104, %100, %105 : vector<8x8xi1>, vector<8x8xf32>
    %cst_27 = arith.constant dense<0.000000e+00> : vector<8xf32>
    %107 = vector.multi_reduction <add>, %106, %cst_27 [1] : vector<8x8xf32> to vector<8xf32>
    %108 = vector.shape_cast %107 : vector<8xf32> to vector<8x1xf32>
    %c1_i32_28 = arith.constant 1 : i32
    %109 = vector.broadcast %c1_i32_28 : i32 to vector<8x8xi32>
    %110 = arith.cmpi eq, %19, %109 : vector<8x8xi32>
    %cst_29 = arith.constant 0.000000e+00 : f32
    %111 = vector.broadcast %cst_29 : f32 to vector<8x8xf32>
    %112 = arith.select %110, %100, %111 : vector<8x8xi1>, vector<8x8xf32>
    %cst_30 = arith.constant dense<0.000000e+00> : vector<8xf32>
    %113 = vector.multi_reduction <add>, %112, %cst_30 [1] : vector<8x8xf32> to vector<8xf32>
    %114 = vector.shape_cast %113 : vector<8xf32> to vector<8x1xf32>
    %c2_i32_31 = arith.constant 2 : i32
    %115 = vector.broadcast %c2_i32_31 : i32 to vector<8x8xi32>
    %116 = arith.cmpi eq, %19, %115 : vector<8x8xi32>
    %cst_32 = arith.constant 0.000000e+00 : f32
    %117 = vector.broadcast %cst_32 : f32 to vector<8x8xf32>
    %118 = arith.select %116, %100, %117 : vector<8x8xi1>, vector<8x8xf32>
    %cst_33 = arith.constant dense<0.000000e+00> : vector<8xf32>
    %119 = vector.multi_reduction <add>, %118, %cst_33 [1] : vector<8x8xf32> to vector<8xf32>
    %120 = vector.shape_cast %119 : vector<8xf32> to vector<8x1xf32>
    %c3_i32_34 = arith.constant 3 : i32
    %121 = vector.broadcast %c3_i32_34 : i32 to vector<8x8xi32>
    %122 = arith.cmpi eq, %19, %121 : vector<8x8xi32>
    %cst_35 = arith.constant 0.000000e+00 : f32
    %123 = vector.broadcast %cst_35 : f32 to vector<8x8xf32>
    %124 = arith.select %122, %100, %123 : vector<8x8xi1>, vector<8x8xf32>
    %cst_36 = arith.constant dense<0.000000e+00> : vector<8xf32>
    %125 = vector.multi_reduction <add>, %124, %cst_36 [1] : vector<8x8xf32> to vector<8xf32>
    %126 = vector.shape_cast %125 : vector<8xf32> to vector<8x1xf32>
    %c4_i32_37 = arith.constant 4 : i32
    %127 = vector.broadcast %c4_i32_37 : i32 to vector<8x8xi32>
    %128 = arith.cmpi eq, %19, %127 : vector<8x8xi32>
    %cst_38 = arith.constant 0.000000e+00 : f32
    %129 = vector.broadcast %cst_38 : f32 to vector<8x8xf32>
    %130 = arith.select %128, %100, %129 : vector<8x8xi1>, vector<8x8xf32>
    %cst_39 = arith.constant dense<0.000000e+00> : vector<8xf32>
    %131 = vector.multi_reduction <add>, %130, %cst_39 [1] : vector<8x8xf32> to vector<8xf32>
    %132 = vector.shape_cast %131 : vector<8xf32> to vector<8x1xf32>
    %c5_i32_40 = arith.constant 5 : i32
    %133 = vector.broadcast %c5_i32_40 : i32 to vector<8x8xi32>
    %134 = arith.cmpi eq, %19, %133 : vector<8x8xi32>
    %cst_41 = arith.constant 0.000000e+00 : f32
    %135 = vector.broadcast %cst_41 : f32 to vector<8x8xf32>
    %136 = arith.select %134, %100, %135 : vector<8x8xi1>, vector<8x8xf32>
    %cst_42 = arith.constant dense<0.000000e+00> : vector<8xf32>
    %137 = vector.multi_reduction <add>, %136, %cst_42 [1] : vector<8x8xf32> to vector<8xf32>
    %138 = vector.shape_cast %137 : vector<8xf32> to vector<8x1xf32>
    %c6_i32_43 = arith.constant 6 : i32
    %139 = vector.broadcast %c6_i32_43 : i32 to vector<8x8xi32>
    %140 = arith.cmpi eq, %19, %139 : vector<8x8xi32>
    %cst_44 = arith.constant 0.000000e+00 : f32
    %141 = vector.broadcast %cst_44 : f32 to vector<8x8xf32>
    %142 = arith.select %140, %100, %141 : vector<8x8xi1>, vector<8x8xf32>
    %cst_45 = arith.constant dense<0.000000e+00> : vector<8xf32>
    %143 = vector.multi_reduction <add>, %142, %cst_45 [1] : vector<8x8xf32> to vector<8xf32>
    %144 = vector.shape_cast %143 : vector<8xf32> to vector<8x1xf32>
    %c7_i32_46 = arith.constant 7 : i32
    %145 = vector.broadcast %c7_i32_46 : i32 to vector<8x8xi32>
    %146 = arith.cmpi eq, %19, %145 : vector<8x8xi32>
    %cst_47 = arith.constant 0.000000e+00 : f32
    %147 = vector.broadcast %cst_47 : f32 to vector<8x8xf32>
    %148 = arith.select %146, %100, %147 : vector<8x8xi1>, vector<8x8xf32>
    %cst_48 = arith.constant dense<0.000000e+00> : vector<8xf32>
    %149 = vector.multi_reduction <add>, %148, %cst_48 [1] : vector<8x8xf32> to vector<8xf32>
    %150 = vector.shape_cast %149 : vector<8xf32> to vector<8x1xf32>
    %c8_i32_49 = arith.constant 8 : i32
    %151 = vector.broadcast %c8_i32_49 : i32 to vector<8x8xi32>
    %152 = arith.cmpi eq, %19, %151 : vector<8x8xi32>
    %cst_50 = arith.constant 0.000000e+00 : f32
    %153 = vector.broadcast %cst_50 : f32 to vector<8x8xf32>
    %154 = arith.select %152, %100, %153 : vector<8x8xi1>, vector<8x8xf32>
    %cst_51 = arith.constant dense<0.000000e+00> : vector<8xf32>
    %155 = vector.multi_reduction <add>, %154, %cst_51 [1] : vector<8x8xf32> to vector<8xf32>
    %156 = vector.shape_cast %155 : vector<8xf32> to vector<8x1xf32>
    %157 = tpu.concatenate %108, %114, %120, %126, %132, %138, %144, %150, %156 in 1 : vector<8x1xf32>, vector<8x1xf32>, vector<8x1xf32>, vector<8x1xf32>, vector<8x1xf32>, vector<8x1xf32>, vector<8x1xf32>, vector<8x1xf32>, vector<8x1xf32> -> vector<8x9xf32>
    %158 = arith.truncf %157 : vector<8x9xf32> to vector<8x9xbf16>
    %cst_52 = arith.constant dense<0.000000e+00> : vector<8x8xf32>
    %159 = tpu.matmul %158, %8, %cst_52 {dimension_numbers = #tpu.dot_dimension_numbers<[1], [0], [0], [1], [0, 0, 1, 1], [], []>} : vector<8x9xbf16>, vector<9x8xbf16>, vector<8x8xf32> -> vector<8x8xf32>
    %160 = arith.addf %102, %159 : vector<8x8xf32>
    %161 = vector.extract_strided_slice %1 {offsets = [0, 8], sizes = [8, 8], strides = [1, 1]} : vector<8x32xbf16> to vector<8x8xbf16>
    %162 = vector.extract_strided_slice %3 {offsets = [0, 8], sizes = [8, 8], strides = [1, 1]} : vector<8x32xbf16> to vector<8x8xbf16>
    %163 = vector.extract_strided_slice %5 {offsets = [0, 8], sizes = [8, 8], strides = [1, 1]} : vector<8x32xbf16> to vector<8x8xbf16>
    %164 = vector.extract_strided_slice %6 {offsets = [1, 0], sizes = [1, 8], strides = [1, 1]} : vector<4x8xf32> to vector<1x8xf32>
    %cst_53 = arith.constant dense<0.000000e+00> : vector<8x8xf32>
    %165 = tpu.matmul %161, %162, %cst_53 {dimension_numbers = #tpu.dot_dimension_numbers<[1], [1], [0], [0], [0, 0, 1, 0], [], []>} : vector<8x8xbf16>, vector<8x8xbf16>, vector<8x8xf32> -> vector<8x8xf32>
    %cst_54 = arith.constant dense<0.000000e+00> : vector<8x9xf32>
    %166 = tpu.matmul %161, %7, %cst_54 {dimension_numbers = #tpu.dot_dimension_numbers<[1], [0], [0], [1], [0, 0, 1, 1], [], []>} : vector<8x8xbf16>, vector<8x9xbf16>, vector<8x9xf32> -> vector<8x9xf32>
    %cst_55 = arith.constant 0.000000e+00 : f32
    %167 = vector.broadcast %cst_55 : f32 to vector<8x8xf32>
    %c0_i32_56 = arith.constant 0 : i32
    %168 = vector.broadcast %c0_i32_56 : i32 to vector<8x8xi32>
    %169 = arith.cmpi eq, %19, %168 : vector<8x8xi32>
    %170 = vector.extract_strided_slice %166 {offsets = [0, 0], sizes = [8, 1], strides = [1, 1]} : vector<8x9xf32> to vector<8x1xf32>
    %171 = vector.shape_cast %170 : vector<8x1xf32> to vector<8x1xf32>
    %172 = vector.broadcast %171 : vector<8x1xf32> to vector<8x8xf32>
    %173 = arith.select %169, %172, %167 : vector<8x8xi1>, vector<8x8xf32>
    %c1_i32_57 = arith.constant 1 : i32
    %174 = vector.broadcast %c1_i32_57 : i32 to vector<8x8xi32>
    %175 = arith.cmpi eq, %19, %174 : vector<8x8xi32>
    %176 = vector.extract_strided_slice %166 {offsets = [0, 1], sizes = [8, 1], strides = [1, 1]} : vector<8x9xf32> to vector<8x1xf32>
    %177 = vector.shape_cast %176 : vector<8x1xf32> to vector<8x1xf32>
    %178 = vector.broadcast %177 : vector<8x1xf32> to vector<8x8xf32>
    %179 = arith.select %175, %178, %173 : vector<8x8xi1>, vector<8x8xf32>
    %c2_i32_58 = arith.constant 2 : i32
    %180 = vector.broadcast %c2_i32_58 : i32 to vector<8x8xi32>
    %181 = arith.cmpi eq, %19, %180 : vector<8x8xi32>
    %182 = vector.extract_strided_slice %166 {offsets = [0, 2], sizes = [8, 1], strides = [1, 1]} : vector<8x9xf32> to vector<8x1xf32>
    %183 = vector.shape_cast %182 : vector<8x1xf32> to vector<8x1xf32>
    %184 = vector.broadcast %183 : vector<8x1xf32> to vector<8x8xf32>
    %185 = arith.select %181, %184, %179 : vector<8x8xi1>, vector<8x8xf32>
    %c3_i32_59 = arith.constant 3 : i32
    %186 = vector.broadcast %c3_i32_59 : i32 to vector<8x8xi32>
    %187 = arith.cmpi eq, %19, %186 : vector<8x8xi32>
    %188 = vector.extract_strided_slice %166 {offsets = [0, 3], sizes = [8, 1], strides = [1, 1]} : vector<8x9xf32> to vector<8x1xf32>
    %189 = vector.shape_cast %188 : vector<8x1xf32> to vector<8x1xf32>
    %190 = vector.broadcast %189 : vector<8x1xf32> to vector<8x8xf32>
    %191 = arith.select %187, %190, %185 : vector<8x8xi1>, vector<8x8xf32>
    %c4_i32_60 = arith.constant 4 : i32
    %192 = vector.broadcast %c4_i32_60 : i32 to vector<8x8xi32>
    %193 = arith.cmpi eq, %19, %192 : vector<8x8xi32>
    %194 = vector.extract_strided_slice %166 {offsets = [0, 4], sizes = [8, 1], strides = [1, 1]} : vector<8x9xf32> to vector<8x1xf32>
    %195 = vector.shape_cast %194 : vector<8x1xf32> to vector<8x1xf32>
    %196 = vector.broadcast %195 : vector<8x1xf32> to vector<8x8xf32>
    %197 = arith.select %193, %196, %191 : vector<8x8xi1>, vector<8x8xf32>
    %c5_i32_61 = arith.constant 5 : i32
    %198 = vector.broadcast %c5_i32_61 : i32 to vector<8x8xi32>
    %199 = arith.cmpi eq, %19, %198 : vector<8x8xi32>
    %200 = vector.extract_strided_slice %166 {offsets = [0, 5], sizes = [8, 1], strides = [1, 1]} : vector<8x9xf32> to vector<8x1xf32>
    %201 = vector.shape_cast %200 : vector<8x1xf32> to vector<8x1xf32>
    %202 = vector.broadcast %201 : vector<8x1xf32> to vector<8x8xf32>
    %203 = arith.select %199, %202, %197 : vector<8x8xi1>, vector<8x8xf32>
    %c6_i32_62 = arith.constant 6 : i32
    %204 = vector.broadcast %c6_i32_62 : i32 to vector<8x8xi32>
    %205 = arith.cmpi eq, %19, %204 : vector<8x8xi32>
    %206 = vector.extract_strided_slice %166 {offsets = [0, 6], sizes = [8, 1], strides = [1, 1]} : vector<8x9xf32> to vector<8x1xf32>
    %207 = vector.shape_cast %206 : vector<8x1xf32> to vector<8x1xf32>
    %208 = vector.broadcast %207 : vector<8x1xf32> to vector<8x8xf32>
    %209 = arith.select %205, %208, %203 : vector<8x8xi1>, vector<8x8xf32>
    %c7_i32_63 = arith.constant 7 : i32
    %210 = vector.broadcast %c7_i32_63 : i32 to vector<8x8xi32>
    %211 = arith.cmpi eq, %19, %210 : vector<8x8xi32>
    %212 = vector.extract_strided_slice %166 {offsets = [0, 7], sizes = [8, 1], strides = [1, 1]} : vector<8x9xf32> to vector<8x1xf32>
    %213 = vector.shape_cast %212 : vector<8x1xf32> to vector<8x1xf32>
    %214 = vector.broadcast %213 : vector<8x1xf32> to vector<8x8xf32>
    %215 = arith.select %211, %214, %209 : vector<8x8xi1>, vector<8x8xf32>
    %c8_i32_64 = arith.constant 8 : i32
    %216 = vector.broadcast %c8_i32_64 : i32 to vector<8x8xi32>
    %217 = arith.cmpi eq, %19, %216 : vector<8x8xi32>
    %218 = vector.extract_strided_slice %166 {offsets = [0, 8], sizes = [8, 1], strides = [1, 1]} : vector<8x9xf32> to vector<8x1xf32>
    %219 = vector.shape_cast %218 : vector<8x1xf32> to vector<8x1xf32>
    %220 = vector.broadcast %219 : vector<8x1xf32> to vector<8x8xf32>
    %221 = arith.select %217, %220, %215 : vector<8x8xi1>, vector<8x8xf32>
    %222 = arith.addf %165, %221 : vector<8x8xf32>
    %223 = vector.broadcast %164 : vector<1x8xf32> to vector<8x8xf32>
    %224 = arith.addf %222, %223 : vector<8x8xf32>
    %cst_65 = arith.constant dense<0xFF800000> : vector<8xf32>
    %225 = vector.multi_reduction <maximumf>, %224, %cst_65 [1] : vector<8x8xf32> to vector<8xf32>
    %226 = vector.shape_cast %225 : vector<8xf32> to vector<8x1xf32>
    %227 = vector.broadcast %226 : vector<8x1xf32> to vector<8x8xf32>
    %228 = arith.subf %224, %227 : vector<8x8xf32>
    %229 = math.exp %228 : vector<8x8xf32>
    %cst_66 = arith.constant dense<0.000000e+00> : vector<8xf32>
    %230 = vector.multi_reduction <add>, %229, %cst_66 [1] : vector<8x8xf32> to vector<8xf32>
    %231 = vector.shape_cast %230 : vector<8xf32> to vector<8x1xf32>
    %232 = tpu.reciprocal %231 {approx = true} : vector<8x1xf32> -> vector<8x1xf32>
    %233 = vector.broadcast %232 : vector<8x1xf32> to vector<8x8xf32>
    %234 = arith.mulf %229, %233 : vector<8x8xf32>
    %cst_67 = arith.constant 0.000000e+00 : f32
    %235 = vector.broadcast %cst_67 : f32 to vector<1x8xf32>
    %236 = arith.cmpf oeq, %164, %235 : vector<1x8xf32>
    %cst_68 = arith.constant 1.000000e+00 : f32
    %cst_69 = arith.constant 0.000000e+00 : f32
    %237 = vector.broadcast %cst_68 : f32 to vector<1x8xf32>
    %238 = vector.broadcast %cst_69 : f32 to vector<1x8xf32>
    %239 = arith.select %236, %237, %238 : vector<1x8xi1>, vector<1x8xf32>
    %240 = vector.broadcast %239 : vector<1x8xf32> to vector<8x8xf32>
    %241 = arith.mulf %234, %240 : vector<8x8xf32>
    %242 = arith.truncf %241 : vector<8x8xf32> to vector<8x8xbf16>
    %cst_70 = arith.constant dense<0.000000e+00> : vector<8x8xf32>
    %243 = tpu.matmul %242, %163, %cst_70 {dimension_numbers = #tpu.dot_dimension_numbers<[1], [0], [0], [1], [0, 0, 1, 1], [], []>} : vector<8x8xbf16>, vector<8x8xbf16>, vector<8x8xf32> -> vector<8x8xf32>
    %c0_i32_71 = arith.constant 0 : i32
    %244 = vector.broadcast %c0_i32_71 : i32 to vector<8x8xi32>
    %245 = arith.cmpi eq, %19, %244 : vector<8x8xi32>
    %cst_72 = arith.constant 0.000000e+00 : f32
    %246 = vector.broadcast %cst_72 : f32 to vector<8x8xf32>
    %247 = arith.select %245, %241, %246 : vector<8x8xi1>, vector<8x8xf32>
    %cst_73 = arith.constant dense<0.000000e+00> : vector<8xf32>
    %248 = vector.multi_reduction <add>, %247, %cst_73 [1] : vector<8x8xf32> to vector<8xf32>
    %249 = vector.shape_cast %248 : vector<8xf32> to vector<8x1xf32>
    %c1_i32_74 = arith.constant 1 : i32
    %250 = vector.broadcast %c1_i32_74 : i32 to vector<8x8xi32>
    %251 = arith.cmpi eq, %19, %250 : vector<8x8xi32>
    %cst_75 = arith.constant 0.000000e+00 : f32
    %252 = vector.broadcast %cst_75 : f32 to vector<8x8xf32>
    %253 = arith.select %251, %241, %252 : vector<8x8xi1>, vector<8x8xf32>
    %cst_76 = arith.constant dense<0.000000e+00> : vector<8xf32>
    %254 = vector.multi_reduction <add>, %253, %cst_76 [1] : vector<8x8xf32> to vector<8xf32>
    %255 = vector.shape_cast %254 : vector<8xf32> to vector<8x1xf32>
    %c2_i32_77 = arith.constant 2 : i32
    %256 = vector.broadcast %c2_i32_77 : i32 to vector<8x8xi32>
    %257 = arith.cmpi eq, %19, %256 : vector<8x8xi32>
    %cst_78 = arith.constant 0.000000e+00 : f32
    %258 = vector.broadcast %cst_78 : f32 to vector<8x8xf32>
    %259 = arith.select %257, %241, %258 : vector<8x8xi1>, vector<8x8xf32>
    %cst_79 = arith.constant dense<0.000000e+00> : vector<8xf32>
    %260 = vector.multi_reduction <add>, %259, %cst_79 [1] : vector<8x8xf32> to vector<8xf32>
    %261 = vector.shape_cast %260 : vector<8xf32> to vector<8x1xf32>
    %c3_i32_80 = arith.constant 3 : i32
    %262 = vector.broadcast %c3_i32_80 : i32 to vector<8x8xi32>
    %263 = arith.cmpi eq, %19, %262 : vector<8x8xi32>
    %cst_81 = arith.constant 0.000000e+00 : f32
    %264 = vector.broadcast %cst_81 : f32 to vector<8x8xf32>
    %265 = arith.select %263, %241, %264 : vector<8x8xi1>, vector<8x8xf32>
    %cst_82 = arith.constant dense<0.000000e+00> : vector<8xf32>
    %266 = vector.multi_reduction <add>, %265, %cst_82 [1] : vector<8x8xf32> to vector<8xf32>
    %267 = vector.shape_cast %266 : vector<8xf32> to vector<8x1xf32>
    %c4_i32_83 = arith.constant 4 : i32
    %268 = vector.broadcast %c4_i32_83 : i32 to vector<8x8xi32>
    %269 = arith.cmpi eq, %19, %268 : vector<8x8xi32>
    %cst_84 = arith.constant 0.000000e+00 : f32
    %270 = vector.broadcast %cst_84 : f32 to vector<8x8xf32>
    %271 = arith.select %269, %241, %270 : vector<8x8xi1>, vector<8x8xf32>
    %cst_85 = arith.constant dense<0.000000e+00> : vector<8xf32>
    %272 = vector.multi_reduction <add>, %271, %cst_85 [1] : vector<8x8xf32> to vector<8xf32>
    %273 = vector.shape_cast %272 : vector<8xf32> to vector<8x1xf32>
    %c5_i32_86 = arith.constant 5 : i32
    %274 = vector.broadcast %c5_i32_86 : i32 to vector<8x8xi32>
    %275 = arith.cmpi eq, %19, %274 : vector<8x8xi32>
    %cst_87 = arith.constant 0.000000e+00 : f32
    %276 = vector.broadcast %cst_87 : f32 to vector<8x8xf32>
    %277 = arith.select %275, %241, %276 : vector<8x8xi1>, vector<8x8xf32>
    %cst_88 = arith.constant dense<0.000000e+00> : vector<8xf32>
    %278 = vector.multi_reduction <add>, %277, %cst_88 [1] : vector<8x8xf32> to vector<8xf32>
    %279 = vector.shape_cast %278 : vector<8xf32> to vector<8x1xf32>
    %c6_i32_89 = arith.constant 6 : i32
    %280 = vector.broadcast %c6_i32_89 : i32 to vector<8x8xi32>
    %281 = arith.cmpi eq, %19, %280 : vector<8x8xi32>
    %cst_90 = arith.constant 0.000000e+00 : f32
    %282 = vector.broadcast %cst_90 : f32 to vector<8x8xf32>
    %283 = arith.select %281, %241, %282 : vector<8x8xi1>, vector<8x8xf32>
    %cst_91 = arith.constant dense<0.000000e+00> : vector<8xf32>
    %284 = vector.multi_reduction <add>, %283, %cst_91 [1] : vector<8x8xf32> to vector<8xf32>
    %285 = vector.shape_cast %284 : vector<8xf32> to vector<8x1xf32>
    %c7_i32_92 = arith.constant 7 : i32
    %286 = vector.broadcast %c7_i32_92 : i32 to vector<8x8xi32>
    %287 = arith.cmpi eq, %19, %286 : vector<8x8xi32>
    %cst_93 = arith.constant 0.000000e+00 : f32
    %288 = vector.broadcast %cst_93 : f32 to vector<8x8xf32>
    %289 = arith.select %287, %241, %288 : vector<8x8xi1>, vector<8x8xf32>
    %cst_94 = arith.constant dense<0.000000e+00> : vector<8xf32>
    %290 = vector.multi_reduction <add>, %289, %cst_94 [1] : vector<8x8xf32> to vector<8xf32>
    %291 = vector.shape_cast %290 : vector<8xf32> to vector<8x1xf32>
    %c8_i32_95 = arith.constant 8 : i32
    %292 = vector.broadcast %c8_i32_95 : i32 to vector<8x8xi32>
    %293 = arith.cmpi eq, %19, %292 : vector<8x8xi32>
    %cst_96 = arith.constant 0.000000e+00 : f32
    %294 = vector.broadcast %cst_96 : f32 to vector<8x8xf32>
    %295 = arith.select %293, %241, %294 : vector<8x8xi1>, vector<8x8xf32>
    %cst_97 = arith.constant dense<0.000000e+00> : vector<8xf32>
    %296 = vector.multi_reduction <add>, %295, %cst_97 [1] : vector<8x8xf32> to vector<8xf32>
    %297 = vector.shape_cast %296 : vector<8xf32> to vector<8x1xf32>
    %298 = tpu.concatenate %249, %255, %261, %267, %273, %279, %285, %291, %297 in 1 : vector<8x1xf32>, vector<8x1xf32>, vector<8x1xf32>, vector<8x1xf32>, vector<8x1xf32>, vector<8x1xf32>, vector<8x1xf32>, vector<8x1xf32>, vector<8x1xf32> -> vector<8x9xf32>
    %299 = arith.truncf %298 : vector<8x9xf32> to vector<8x9xbf16>
    %cst_98 = arith.constant dense<0.000000e+00> : vector<8x8xf32>
    %300 = tpu.matmul %299, %8, %cst_98 {dimension_numbers = #tpu.dot_dimension_numbers<[1], [0], [0], [1], [0, 0, 1, 1], [], []>} : vector<8x9xbf16>, vector<9x8xbf16>, vector<8x8xf32> -> vector<8x8xf32>
    %301 = arith.addf %243, %300 : vector<8x8xf32>
    %302 = vector.extract_strided_slice %1 {offsets = [0, 16], sizes = [8, 8], strides = [1, 1]} : vector<8x32xbf16> to vector<8x8xbf16>
    %303 = vector.extract_strided_slice %3 {offsets = [0, 16], sizes = [8, 8], strides = [1, 1]} : vector<8x32xbf16> to vector<8x8xbf16>
    %304 = vector.extract_strided_slice %5 {offsets = [0, 16], sizes = [8, 8], strides = [1, 1]} : vector<8x32xbf16> to vector<8x8xbf16>
    %305 = vector.extract_strided_slice %6 {offsets = [2, 0], sizes = [1, 8], strides = [1, 1]} : vector<4x8xf32> to vector<1x8xf32>
    %cst_99 = arith.constant dense<0.000000e+00> : vector<8x8xf32>
    %306 = tpu.matmul %302, %303, %cst_99 {dimension_numbers = #tpu.dot_dimension_numbers<[1], [1], [0], [0], [0, 0, 1, 0], [], []>} : vector<8x8xbf16>, vector<8x8xbf16>, vector<8x8xf32> -> vector<8x8xf32>
    %cst_100 = arith.constant dense<0.000000e+00> : vector<8x9xf32>
    %307 = tpu.matmul %302, %7, %cst_100 {dimension_numbers = #tpu.dot_dimension_numbers<[1], [0], [0], [1], [0, 0, 1, 1], [], []>} : vector<8x8xbf16>, vector<8x9xbf16>, vector<8x9xf32> -> vector<8x9xf32>
    %cst_101 = arith.constant 0.000000e+00 : f32
    %308 = vector.broadcast %cst_101 : f32 to vector<8x8xf32>
    %c0_i32_102 = arith.constant 0 : i32
    %309 = vector.broadcast %c0_i32_102 : i32 to vector<8x8xi32>
    %310 = arith.cmpi eq, %19, %309 : vector<8x8xi32>
    %311 = vector.extract_strided_slice %307 {offsets = [0, 0], sizes = [8, 1], strides = [1, 1]} : vector<8x9xf32> to vector<8x1xf32>
    %312 = vector.shape_cast %311 : vector<8x1xf32> to vector<8x1xf32>
    %313 = vector.broadcast %312 : vector<8x1xf32> to vector<8x8xf32>
    %314 = arith.select %310, %313, %308 : vector<8x8xi1>, vector<8x8xf32>
    %c1_i32_103 = arith.constant 1 : i32
    %315 = vector.broadcast %c1_i32_103 : i32 to vector<8x8xi32>
    %316 = arith.cmpi eq, %19, %315 : vector<8x8xi32>
    %317 = vector.extract_strided_slice %307 {offsets = [0, 1], sizes = [8, 1], strides = [1, 1]} : vector<8x9xf32> to vector<8x1xf32>
    %318 = vector.shape_cast %317 : vector<8x1xf32> to vector<8x1xf32>
    %319 = vector.broadcast %318 : vector<8x1xf32> to vector<8x8xf32>
    %320 = arith.select %316, %319, %314 : vector<8x8xi1>, vector<8x8xf32>
    %c2_i32_104 = arith.constant 2 : i32
    %321 = vector.broadcast %c2_i32_104 : i32 to vector<8x8xi32>
    %322 = arith.cmpi eq, %19, %321 : vector<8x8xi32>
    %323 = vector.extract_strided_slice %307 {offsets = [0, 2], sizes = [8, 1], strides = [1, 1]} : vector<8x9xf32> to vector<8x1xf32>
    %324 = vector.shape_cast %323 : vector<8x1xf32> to vector<8x1xf32>
    %325 = vector.broadcast %324 : vector<8x1xf32> to vector<8x8xf32>
    %326 = arith.select %322, %325, %320 : vector<8x8xi1>, vector<8x8xf32>
    %c3_i32_105 = arith.constant 3 : i32
    %327 = vector.broadcast %c3_i32_105 : i32 to vector<8x8xi32>
    %328 = arith.cmpi eq, %19, %327 : vector<8x8xi32>
    %329 = vector.extract_strided_slice %307 {offsets = [0, 3], sizes = [8, 1], strides = [1, 1]} : vector<8x9xf32> to vector<8x1xf32>
    %330 = vector.shape_cast %329 : vector<8x1xf32> to vector<8x1xf32>
    %331 = vector.broadcast %330 : vector<8x1xf32> to vector<8x8xf32>
    %332 = arith.select %328, %331, %326 : vector<8x8xi1>, vector<8x8xf32>
    %c4_i32_106 = arith.constant 4 : i32
    %333 = vector.broadcast %c4_i32_106 : i32 to vector<8x8xi32>
    %334 = arith.cmpi eq, %19, %333 : vector<8x8xi32>
    %335 = vector.extract_strided_slice %307 {offsets = [0, 4], sizes = [8, 1], strides = [1, 1]} : vector<8x9xf32> to vector<8x1xf32>
    %336 = vector.shape_cast %335 : vector<8x1xf32> to vector<8x1xf32>
    %337 = vector.broadcast %336 : vector<8x1xf32> to vector<8x8xf32>
    %338 = arith.select %334, %337, %332 : vector<8x8xi1>, vector<8x8xf32>
    %c5_i32_107 = arith.constant 5 : i32
    %339 = vector.broadcast %c5_i32_107 : i32 to vector<8x8xi32>
    %340 = arith.cmpi eq, %19, %339 : vector<8x8xi32>
    %341 = vector.extract_strided_slice %307 {offsets = [0, 5], sizes = [8, 1], strides = [1, 1]} : vector<8x9xf32> to vector<8x1xf32>
    %342 = vector.shape_cast %341 : vector<8x1xf32> to vector<8x1xf32>
    %343 = vector.broadcast %342 : vector<8x1xf32> to vector<8x8xf32>
    %344 = arith.select %340, %343, %338 : vector<8x8xi1>, vector<8x8xf32>
    %c6_i32_108 = arith.constant 6 : i32
    %345 = vector.broadcast %c6_i32_108 : i32 to vector<8x8xi32>
    %346 = arith.cmpi eq, %19, %345 : vector<8x8xi32>
    %347 = vector.extract_strided_slice %307 {offsets = [0, 6], sizes = [8, 1], strides = [1, 1]} : vector<8x9xf32> to vector<8x1xf32>
    %348 = vector.shape_cast %347 : vector<8x1xf32> to vector<8x1xf32>
    %349 = vector.broadcast %348 : vector<8x1xf32> to vector<8x8xf32>
    %350 = arith.select %346, %349, %344 : vector<8x8xi1>, vector<8x8xf32>
    %c7_i32_109 = arith.constant 7 : i32
    %351 = vector.broadcast %c7_i32_109 : i32 to vector<8x8xi32>
    %352 = arith.cmpi eq, %19, %351 : vector<8x8xi32>
    %353 = vector.extract_strided_slice %307 {offsets = [0, 7], sizes = [8, 1], strides = [1, 1]} : vector<8x9xf32> to vector<8x1xf32>
    %354 = vector.shape_cast %353 : vector<8x1xf32> to vector<8x1xf32>
    %355 = vector.broadcast %354 : vector<8x1xf32> to vector<8x8xf32>
    %356 = arith.select %352, %355, %350 : vector<8x8xi1>, vector<8x8xf32>
    %c8_i32_110 = arith.constant 8 : i32
    %357 = vector.broadcast %c8_i32_110 : i32 to vector<8x8xi32>
    %358 = arith.cmpi eq, %19, %357 : vector<8x8xi32>
    %359 = vector.extract_strided_slice %307 {offsets = [0, 8], sizes = [8, 1], strides = [1, 1]} : vector<8x9xf32> to vector<8x1xf32>
    %360 = vector.shape_cast %359 : vector<8x1xf32> to vector<8x1xf32>
    %361 = vector.broadcast %360 : vector<8x1xf32> to vector<8x8xf32>
    %362 = arith.select %358, %361, %356 : vector<8x8xi1>, vector<8x8xf32>
    %363 = arith.addf %306, %362 : vector<8x8xf32>
    %364 = vector.broadcast %305 : vector<1x8xf32> to vector<8x8xf32>
    %365 = arith.addf %363, %364 : vector<8x8xf32>
    %cst_111 = arith.constant dense<0xFF800000> : vector<8xf32>
    %366 = vector.multi_reduction <maximumf>, %365, %cst_111 [1] : vector<8x8xf32> to vector<8xf32>
    %367 = vector.shape_cast %366 : vector<8xf32> to vector<8x1xf32>
    %368 = vector.broadcast %367 : vector<8x1xf32> to vector<8x8xf32>
    %369 = arith.subf %365, %368 : vector<8x8xf32>
    %370 = math.exp %369 : vector<8x8xf32>
    %cst_112 = arith.constant dense<0.000000e+00> : vector<8xf32>
    %371 = vector.multi_reduction <add>, %370, %cst_112 [1] : vector<8x8xf32> to vector<8xf32>
    %372 = vector.shape_cast %371 : vector<8xf32> to vector<8x1xf32>
    %373 = tpu.reciprocal %372 {approx = true} : vector<8x1xf32> -> vector<8x1xf32>
    %374 = vector.broadcast %373 : vector<8x1xf32> to vector<8x8xf32>
    %375 = arith.mulf %370, %374 : vector<8x8xf32>
    %cst_113 = arith.constant 0.000000e+00 : f32
    %376 = vector.broadcast %cst_113 : f32 to vector<1x8xf32>
    %377 = arith.cmpf oeq, %305, %376 : vector<1x8xf32>
    %cst_114 = arith.constant 1.000000e+00 : f32
    %cst_115 = arith.constant 0.000000e+00 : f32
    %378 = vector.broadcast %cst_114 : f32 to vector<1x8xf32>
    %379 = vector.broadcast %cst_115 : f32 to vector<1x8xf32>
    %380 = arith.select %377, %378, %379 : vector<1x8xi1>, vector<1x8xf32>
    %381 = vector.broadcast %380 : vector<1x8xf32> to vector<8x8xf32>
    %382 = arith.mulf %375, %381 : vector<8x8xf32>
    %383 = arith.truncf %382 : vector<8x8xf32> to vector<8x8xbf16>
    %cst_116 = arith.constant dense<0.000000e+00> : vector<8x8xf32>
    %384 = tpu.matmul %383, %304, %cst_116 {dimension_numbers = #tpu.dot_dimension_numbers<[1], [0], [0], [1], [0, 0, 1, 1], [], []>} : vector<8x8xbf16>, vector<8x8xbf16>, vector<8x8xf32> -> vector<8x8xf32>
    %c0_i32_117 = arith.constant 0 : i32
    %385 = vector.broadcast %c0_i32_117 : i32 to vector<8x8xi32>
    %386 = arith.cmpi eq, %19, %385 : vector<8x8xi32>
    %cst_118 = arith.constant 0.000000e+00 : f32
    %387 = vector.broadcast %cst_118 : f32 to vector<8x8xf32>
    %388 = arith.select %386, %382, %387 : vector<8x8xi1>, vector<8x8xf32>
    %cst_119 = arith.constant dense<0.000000e+00> : vector<8xf32>
    %389 = vector.multi_reduction <add>, %388, %cst_119 [1] : vector<8x8xf32> to vector<8xf32>
    %390 = vector.shape_cast %389 : vector<8xf32> to vector<8x1xf32>
    %c1_i32_120 = arith.constant 1 : i32
    %391 = vector.broadcast %c1_i32_120 : i32 to vector<8x8xi32>
    %392 = arith.cmpi eq, %19, %391 : vector<8x8xi32>
    %cst_121 = arith.constant 0.000000e+00 : f32
    %393 = vector.broadcast %cst_121 : f32 to vector<8x8xf32>
    %394 = arith.select %392, %382, %393 : vector<8x8xi1>, vector<8x8xf32>
    %cst_122 = arith.constant dense<0.000000e+00> : vector<8xf32>
    %395 = vector.multi_reduction <add>, %394, %cst_122 [1] : vector<8x8xf32> to vector<8xf32>
    %396 = vector.shape_cast %395 : vector<8xf32> to vector<8x1xf32>
    %c2_i32_123 = arith.constant 2 : i32
    %397 = vector.broadcast %c2_i32_123 : i32 to vector<8x8xi32>
    %398 = arith.cmpi eq, %19, %397 : vector<8x8xi32>
    %cst_124 = arith.constant 0.000000e+00 : f32
    %399 = vector.broadcast %cst_124 : f32 to vector<8x8xf32>
    %400 = arith.select %398, %382, %399 : vector<8x8xi1>, vector<8x8xf32>
    %cst_125 = arith.constant dense<0.000000e+00> : vector<8xf32>
    %401 = vector.multi_reduction <add>, %400, %cst_125 [1] : vector<8x8xf32> to vector<8xf32>
    %402 = vector.shape_cast %401 : vector<8xf32> to vector<8x1xf32>
    %c3_i32_126 = arith.constant 3 : i32
    %403 = vector.broadcast %c3_i32_126 : i32 to vector<8x8xi32>
    %404 = arith.cmpi eq, %19, %403 : vector<8x8xi32>
    %cst_127 = arith.constant 0.000000e+00 : f32
    %405 = vector.broadcast %cst_127 : f32 to vector<8x8xf32>
    %406 = arith.select %404, %382, %405 : vector<8x8xi1>, vector<8x8xf32>
    %cst_128 = arith.constant dense<0.000000e+00> : vector<8xf32>
    %407 = vector.multi_reduction <add>, %406, %cst_128 [1] : vector<8x8xf32> to vector<8xf32>
    %408 = vector.shape_cast %407 : vector<8xf32> to vector<8x1xf32>
    %c4_i32_129 = arith.constant 4 : i32
    %409 = vector.broadcast %c4_i32_129 : i32 to vector<8x8xi32>
    %410 = arith.cmpi eq, %19, %409 : vector<8x8xi32>
    %cst_130 = arith.constant 0.000000e+00 : f32
    %411 = vector.broadcast %cst_130 : f32 to vector<8x8xf32>
    %412 = arith.select %410, %382, %411 : vector<8x8xi1>, vector<8x8xf32>
    %cst_131 = arith.constant dense<0.000000e+00> : vector<8xf32>
    %413 = vector.multi_reduction <add>, %412, %cst_131 [1] : vector<8x8xf32> to vector<8xf32>
    %414 = vector.shape_cast %413 : vector<8xf32> to vector<8x1xf32>
    %c5_i32_132 = arith.constant 5 : i32
    %415 = vector.broadcast %c5_i32_132 : i32 to vector<8x8xi32>
    %416 = arith.cmpi eq, %19, %415 : vector<8x8xi32>
    %cst_133 = arith.constant 0.000000e+00 : f32
    %417 = vector.broadcast %cst_133 : f32 to vector<8x8xf32>
    %418 = arith.select %416, %382, %417 : vector<8x8xi1>, vector<8x8xf32>
    %cst_134 = arith.constant dense<0.000000e+00> : vector<8xf32>
    %419 = vector.multi_reduction <add>, %418, %cst_134 [1] : vector<8x8xf32> to vector<8xf32>
    %420 = vector.shape_cast %419 : vector<8xf32> to vector<8x1xf32>
    %c6_i32_135 = arith.constant 6 : i32
    %421 = vector.broadcast %c6_i32_135 : i32 to vector<8x8xi32>
    %422 = arith.cmpi eq, %19, %421 : vector<8x8xi32>
    %cst_136 = arith.constant 0.000000e+00 : f32
    %423 = vector.broadcast %cst_136 : f32 to vector<8x8xf32>
    %424 = arith.select %422, %382, %423 : vector<8x8xi1>, vector<8x8xf32>
    %cst_137 = arith.constant dense<0.000000e+00> : vector<8xf32>
    %425 = vector.multi_reduction <add>, %424, %cst_137 [1] : vector<8x8xf32> to vector<8xf32>
    %426 = vector.shape_cast %425 : vector<8xf32> to vector<8x1xf32>
    %c7_i32_138 = arith.constant 7 : i32
    %427 = vector.broadcast %c7_i32_138 : i32 to vector<8x8xi32>
    %428 = arith.cmpi eq, %19, %427 : vector<8x8xi32>
    %cst_139 = arith.constant 0.000000e+00 : f32
    %429 = vector.broadcast %cst_139 : f32 to vector<8x8xf32>
    %430 = arith.select %428, %382, %429 : vector<8x8xi1>, vector<8x8xf32>
    %cst_140 = arith.constant dense<0.000000e+00> : vector<8xf32>
    %431 = vector.multi_reduction <add>, %430, %cst_140 [1] : vector<8x8xf32> to vector<8xf32>
    %432 = vector.shape_cast %431 : vector<8xf32> to vector<8x1xf32>
    %c8_i32_141 = arith.constant 8 : i32
    %433 = vector.broadcast %c8_i32_141 : i32 to vector<8x8xi32>
    %434 = arith.cmpi eq, %19, %433 : vector<8x8xi32>
    %cst_142 = arith.constant 0.000000e+00 : f32
    %435 = vector.broadcast %cst_142 : f32 to vector<8x8xf32>
    %436 = arith.select %434, %382, %435 : vector<8x8xi1>, vector<8x8xf32>
    %cst_143 = arith.constant dense<0.000000e+00> : vector<8xf32>
    %437 = vector.multi_reduction <add>, %436, %cst_143 [1] : vector<8x8xf32> to vector<8xf32>
    %438 = vector.shape_cast %437 : vector<8xf32> to vector<8x1xf32>
    %439 = tpu.concatenate %390, %396, %402, %408, %414, %420, %426, %432, %438 in 1 : vector<8x1xf32>, vector<8x1xf32>, vector<8x1xf32>, vector<8x1xf32>, vector<8x1xf32>, vector<8x1xf32>, vector<8x1xf32>, vector<8x1xf32>, vector<8x1xf32> -> vector<8x9xf32>
    %440 = arith.truncf %439 : vector<8x9xf32> to vector<8x9xbf16>
    %cst_144 = arith.constant dense<0.000000e+00> : vector<8x8xf32>
    %441 = tpu.matmul %440, %8, %cst_144 {dimension_numbers = #tpu.dot_dimension_numbers<[1], [0], [0], [1], [0, 0, 1, 1], [], []>} : vector<8x9xbf16>, vector<9x8xbf16>, vector<8x8xf32> -> vector<8x8xf32>
    %442 = arith.addf %384, %441 : vector<8x8xf32>
    %443 = vector.extract_strided_slice %1 {offsets = [0, 24], sizes = [8, 8], strides = [1, 1]} : vector<8x32xbf16> to vector<8x8xbf16>
    %444 = vector.extract_strided_slice %3 {offsets = [0, 24], sizes = [8, 8], strides = [1, 1]} : vector<8x32xbf16> to vector<8x8xbf16>
    %445 = vector.extract_strided_slice %5 {offsets = [0, 24], sizes = [8, 8], strides = [1, 1]} : vector<8x32xbf16> to vector<8x8xbf16>
    %446 = vector.extract_strided_slice %6 {offsets = [3, 0], sizes = [1, 8], strides = [1, 1]} : vector<4x8xf32> to vector<1x8xf32>
    %cst_145 = arith.constant dense<0.000000e+00> : vector<8x8xf32>
    %447 = tpu.matmul %443, %444, %cst_145 {dimension_numbers = #tpu.dot_dimension_numbers<[1], [1], [0], [0], [0, 0, 1, 0], [], []>} : vector<8x8xbf16>, vector<8x8xbf16>, vector<8x8xf32> -> vector<8x8xf32>
    %cst_146 = arith.constant dense<0.000000e+00> : vector<8x9xf32>
    %448 = tpu.matmul %443, %7, %cst_146 {dimension_numbers = #tpu.dot_dimension_numbers<[1], [0], [0], [1], [0, 0, 1, 1], [], []>} : vector<8x8xbf16>, vector<8x9xbf16>, vector<8x9xf32> -> vector<8x9xf32>
    %cst_147 = arith.constant 0.000000e+00 : f32
    %449 = vector.broadcast %cst_147 : f32 to vector<8x8xf32>
    %c0_i32_148 = arith.constant 0 : i32
    %450 = vector.broadcast %c0_i32_148 : i32 to vector<8x8xi32>
    %451 = arith.cmpi eq, %19, %450 : vector<8x8xi32>
    %452 = vector.extract_strided_slice %448 {offsets = [0, 0], sizes = [8, 1], strides = [1, 1]} : vector<8x9xf32> to vector<8x1xf32>
    %453 = vector.shape_cast %452 : vector<8x1xf32> to vector<8x1xf32>
    %454 = vector.broadcast %453 : vector<8x1xf32> to vector<8x8xf32>
    %455 = arith.select %451, %454, %449 : vector<8x8xi1>, vector<8x8xf32>
    %c1_i32_149 = arith.constant 1 : i32
    %456 = vector.broadcast %c1_i32_149 : i32 to vector<8x8xi32>
    %457 = arith.cmpi eq, %19, %456 : vector<8x8xi32>
    %458 = vector.extract_strided_slice %448 {offsets = [0, 1], sizes = [8, 1], strides = [1, 1]} : vector<8x9xf32> to vector<8x1xf32>
    %459 = vector.shape_cast %458 : vector<8x1xf32> to vector<8x1xf32>
    %460 = vector.broadcast %459 : vector<8x1xf32> to vector<8x8xf32>
    %461 = arith.select %457, %460, %455 : vector<8x8xi1>, vector<8x8xf32>
    %c2_i32_150 = arith.constant 2 : i32
    %462 = vector.broadcast %c2_i32_150 : i32 to vector<8x8xi32>
    %463 = arith.cmpi eq, %19, %462 : vector<8x8xi32>
    %464 = vector.extract_strided_slice %448 {offsets = [0, 2], sizes = [8, 1], strides = [1, 1]} : vector<8x9xf32> to vector<8x1xf32>
    %465 = vector.shape_cast %464 : vector<8x1xf32> to vector<8x1xf32>
    %466 = vector.broadcast %465 : vector<8x1xf32> to vector<8x8xf32>
    %467 = arith.select %463, %466, %461 : vector<8x8xi1>, vector<8x8xf32>
    %c3_i32_151 = arith.constant 3 : i32
    %468 = vector.broadcast %c3_i32_151 : i32 to vector<8x8xi32>
    %469 = arith.cmpi eq, %19, %468 : vector<8x8xi32>
    %470 = vector.extract_strided_slice %448 {offsets = [0, 3], sizes = [8, 1], strides = [1, 1]} : vector<8x9xf32> to vector<8x1xf32>
    %471 = vector.shape_cast %470 : vector<8x1xf32> to vector<8x1xf32>
    %472 = vector.broadcast %471 : vector<8x1xf32> to vector<8x8xf32>
    %473 = arith.select %469, %472, %467 : vector<8x8xi1>, vector<8x8xf32>
    %c4_i32_152 = arith.constant 4 : i32
    %474 = vector.broadcast %c4_i32_152 : i32 to vector<8x8xi32>
    %475 = arith.cmpi eq, %19, %474 : vector<8x8xi32>
    %476 = vector.extract_strided_slice %448 {offsets = [0, 4], sizes = [8, 1], strides = [1, 1]} : vector<8x9xf32> to vector<8x1xf32>
    %477 = vector.shape_cast %476 : vector<8x1xf32> to vector<8x1xf32>
    %478 = vector.broadcast %477 : vector<8x1xf32> to vector<8x8xf32>
    %479 = arith.select %475, %478, %473 : vector<8x8xi1>, vector<8x8xf32>
    %c5_i32_153 = arith.constant 5 : i32
    %480 = vector.broadcast %c5_i32_153 : i32 to vector<8x8xi32>
    %481 = arith.cmpi eq, %19, %480 : vector<8x8xi32>
    %482 = vector.extract_strided_slice %448 {offsets = [0, 5], sizes = [8, 1], strides = [1, 1]} : vector<8x9xf32> to vector<8x1xf32>
    %483 = vector.shape_cast %482 : vector<8x1xf32> to vector<8x1xf32>
    %484 = vector.broadcast %483 : vector<8x1xf32> to vector<8x8xf32>
    %485 = arith.select %481, %484, %479 : vector<8x8xi1>, vector<8x8xf32>
    %c6_i32_154 = arith.constant 6 : i32
    %486 = vector.broadcast %c6_i32_154 : i32 to vector<8x8xi32>
    %487 = arith.cmpi eq, %19, %486 : vector<8x8xi32>
    %488 = vector.extract_strided_slice %448 {offsets = [0, 6], sizes = [8, 1], strides = [1, 1]} : vector<8x9xf32> to vector<8x1xf32>
    %489 = vector.shape_cast %488 : vector<8x1xf32> to vector<8x1xf32>
    %490 = vector.broadcast %489 : vector<8x1xf32> to vector<8x8xf32>
    %491 = arith.select %487, %490, %485 : vector<8x8xi1>, vector<8x8xf32>
    %c7_i32_155 = arith.constant 7 : i32
    %492 = vector.broadcast %c7_i32_155 : i32 to vector<8x8xi32>
    %493 = arith.cmpi eq, %19, %492 : vector<8x8xi32>
    %494 = vector.extract_strided_slice %448 {offsets = [0, 7], sizes = [8, 1], strides = [1, 1]} : vector<8x9xf32> to vector<8x1xf32>
    %495 = vector.shape_cast %494 : vector<8x1xf32> to vector<8x1xf32>
    %496 = vector.broadcast %495 : vector<8x1xf32> to vector<8x8xf32>
    %497 = arith.select %493, %496, %491 : vector<8x8xi1>, vector<8x8xf32>
    %c8_i32_156 = arith.constant 8 : i32
    %498 = vector.broadcast %c8_i32_156 : i32 to vector<8x8xi32>
    %499 = arith.cmpi eq, %19, %498 : vector<8x8xi32>
    %500 = vector.extract_strided_slice %448 {offsets = [0, 8], sizes = [8, 1], strides = [1, 1]} : vector<8x9xf32> to vector<8x1xf32>
    %501 = vector.shape_cast %500 : vector<8x1xf32> to vector<8x1xf32>
    %502 = vector.broadcast %501 : vector<8x1xf32> to vector<8x8xf32>
    %503 = arith.select %499, %502, %497 : vector<8x8xi1>, vector<8x8xf32>
    %504 = arith.addf %447, %503 : vector<8x8xf32>
    %505 = vector.broadcast %446 : vector<1x8xf32> to vector<8x8xf32>
    %506 = arith.addf %504, %505 : vector<8x8xf32>
    %cst_157 = arith.constant dense<0xFF800000> : vector<8xf32>
    %507 = vector.multi_reduction <maximumf>, %506, %cst_157 [1] : vector<8x8xf32> to vector<8xf32>
    %508 = vector.shape_cast %507 : vector<8xf32> to vector<8x1xf32>
    %509 = vector.broadcast %508 : vector<8x1xf32> to vector<8x8xf32>
    %510 = arith.subf %506, %509 : vector<8x8xf32>
    %511 = math.exp %510 : vector<8x8xf32>
    %cst_158 = arith.constant dense<0.000000e+00> : vector<8xf32>
    %512 = vector.multi_reduction <add>, %511, %cst_158 [1] : vector<8x8xf32> to vector<8xf32>
    %513 = vector.shape_cast %512 : vector<8xf32> to vector<8x1xf32>
    %514 = tpu.reciprocal %513 {approx = true} : vector<8x1xf32> -> vector<8x1xf32>
    %515 = vector.broadcast %514 : vector<8x1xf32> to vector<8x8xf32>
    %516 = arith.mulf %511, %515 : vector<8x8xf32>
    %cst_159 = arith.constant 0.000000e+00 : f32
    %517 = vector.broadcast %cst_159 : f32 to vector<1x8xf32>
    %518 = arith.cmpf oeq, %446, %517 : vector<1x8xf32>
    %cst_160 = arith.constant 1.000000e+00 : f32
    %cst_161 = arith.constant 0.000000e+00 : f32
    %519 = vector.broadcast %cst_160 : f32 to vector<1x8xf32>
    %520 = vector.broadcast %cst_161 : f32 to vector<1x8xf32>
    %521 = arith.select %518, %519, %520 : vector<1x8xi1>, vector<1x8xf32>
    %522 = vector.broadcast %521 : vector<1x8xf32> to vector<8x8xf32>
    %523 = arith.mulf %516, %522 : vector<8x8xf32>
    %524 = arith.truncf %523 : vector<8x8xf32> to vector<8x8xbf16>
    %cst_162 = arith.constant dense<0.000000e+00> : vector<8x8xf32>
    %525 = tpu.matmul %524, %445, %cst_162 {dimension_numbers = #tpu.dot_dimension_numbers<[1], [0], [0], [1], [0, 0, 1, 1], [], []>} : vector<8x8xbf16>, vector<8x8xbf16>, vector<8x8xf32> -> vector<8x8xf32>
    %c0_i32_163 = arith.constant 0 : i32
    %526 = vector.broadcast %c0_i32_163 : i32 to vector<8x8xi32>
    %527 = arith.cmpi eq, %19, %526 : vector<8x8xi32>
    %cst_164 = arith.constant 0.000000e+00 : f32
    %528 = vector.broadcast %cst_164 : f32 to vector<8x8xf32>
    %529 = arith.select %527, %523, %528 : vector<8x8xi1>, vector<8x8xf32>
    %cst_165 = arith.constant dense<0.000000e+00> : vector<8xf32>
    %530 = vector.multi_reduction <add>, %529, %cst_165 [1] : vector<8x8xf32> to vector<8xf32>
    %531 = vector.shape_cast %530 : vector<8xf32> to vector<8x1xf32>
    %c1_i32_166 = arith.constant 1 : i32
    %532 = vector.broadcast %c1_i32_166 : i32 to vector<8x8xi32>
    %533 = arith.cmpi eq, %19, %532 : vector<8x8xi32>
    %cst_167 = arith.constant 0.000000e+00 : f32
    %534 = vector.broadcast %cst_167 : f32 to vector<8x8xf32>
    %535 = arith.select %533, %523, %534 : vector<8x8xi1>, vector<8x8xf32>
    %cst_168 = arith.constant dense<0.000000e+00> : vector<8xf32>
    %536 = vector.multi_reduction <add>, %535, %cst_168 [1] : vector<8x8xf32> to vector<8xf32>
    %537 = vector.shape_cast %536 : vector<8xf32> to vector<8x1xf32>
    %c2_i32_169 = arith.constant 2 : i32
    %538 = vector.broadcast %c2_i32_169 : i32 to vector<8x8xi32>
    %539 = arith.cmpi eq, %19, %538 : vector<8x8xi32>
    %cst_170 = arith.constant 0.000000e+00 : f32
    %540 = vector.broadcast %cst_170 : f32 to vector<8x8xf32>
    %541 = arith.select %539, %523, %540 : vector<8x8xi1>, vector<8x8xf32>
    %cst_171 = arith.constant dense<0.000000e+00> : vector<8xf32>
    %542 = vector.multi_reduction <add>, %541, %cst_171 [1] : vector<8x8xf32> to vector<8xf32>
    %543 = vector.shape_cast %542 : vector<8xf32> to vector<8x1xf32>
    %c3_i32_172 = arith.constant 3 : i32
    %544 = vector.broadcast %c3_i32_172 : i32 to vector<8x8xi32>
    %545 = arith.cmpi eq, %19, %544 : vector<8x8xi32>
    %cst_173 = arith.constant 0.000000e+00 : f32
    %546 = vector.broadcast %cst_173 : f32 to vector<8x8xf32>
    %547 = arith.select %545, %523, %546 : vector<8x8xi1>, vector<8x8xf32>
    %cst_174 = arith.constant dense<0.000000e+00> : vector<8xf32>
    %548 = vector.multi_reduction <add>, %547, %cst_174 [1] : vector<8x8xf32> to vector<8xf32>
    %549 = vector.shape_cast %548 : vector<8xf32> to vector<8x1xf32>
    %c4_i32_175 = arith.constant 4 : i32
    %550 = vector.broadcast %c4_i32_175 : i32 to vector<8x8xi32>
    %551 = arith.cmpi eq, %19, %550 : vector<8x8xi32>
    %cst_176 = arith.constant 0.000000e+00 : f32
    %552 = vector.broadcast %cst_176 : f32 to vector<8x8xf32>
    %553 = arith.select %551, %523, %552 : vector<8x8xi1>, vector<8x8xf32>
    %cst_177 = arith.constant dense<0.000000e+00> : vector<8xf32>
    %554 = vector.multi_reduction <add>, %553, %cst_177 [1] : vector<8x8xf32> to vector<8xf32>
    %555 = vector.shape_cast %554 : vector<8xf32> to vector<8x1xf32>
    %c5_i32_178 = arith.constant 5 : i32
    %556 = vector.broadcast %c5_i32_178 : i32 to vector<8x8xi32>
    %557 = arith.cmpi eq, %19, %556 : vector<8x8xi32>
    %cst_179 = arith.constant 0.000000e+00 : f32
    %558 = vector.broadcast %cst_179 : f32 to vector<8x8xf32>
    %559 = arith.select %557, %523, %558 : vector<8x8xi1>, vector<8x8xf32>
    %cst_180 = arith.constant dense<0.000000e+00> : vector<8xf32>
    %560 = vector.multi_reduction <add>, %559, %cst_180 [1] : vector<8x8xf32> to vector<8xf32>
    %561 = vector.shape_cast %560 : vector<8xf32> to vector<8x1xf32>
    %c6_i32_181 = arith.constant 6 : i32
    %562 = vector.broadcast %c6_i32_181 : i32 to vector<8x8xi32>
    %563 = arith.cmpi eq, %19, %562 : vector<8x8xi32>
    %cst_182 = arith.constant 0.000000e+00 : f32
    %564 = vector.broadcast %cst_182 : f32 to vector<8x8xf32>
    %565 = arith.select %563, %523, %564 : vector<8x8xi1>, vector<8x8xf32>
    %cst_183 = arith.constant dense<0.000000e+00> : vector<8xf32>
    %566 = vector.multi_reduction <add>, %565, %cst_183 [1] : vector<8x8xf32> to vector<8xf32>
    %567 = vector.shape_cast %566 : vector<8xf32> to vector<8x1xf32>
    %c7_i32_184 = arith.constant 7 : i32
    %568 = vector.broadcast %c7_i32_184 : i32 to vector<8x8xi32>
    %569 = arith.cmpi eq, %19, %568 : vector<8x8xi32>
    %cst_185 = arith.constant 0.000000e+00 : f32
    %570 = vector.broadcast %cst_185 : f32 to vector<8x8xf32>
    %571 = arith.select %569, %523, %570 : vector<8x8xi1>, vector<8x8xf32>
    %cst_186 = arith.constant dense<0.000000e+00> : vector<8xf32>
    %572 = vector.multi_reduction <add>, %571, %cst_186 [1] : vector<8x8xf32> to vector<8xf32>
    %573 = vector.shape_cast %572 : vector<8xf32> to vector<8x1xf32>
    %c8_i32_187 = arith.constant 8 : i32
    %574 = vector.broadcast %c8_i32_187 : i32 to vector<8x8xi32>
    %575 = arith.cmpi eq, %19, %574 : vector<8x8xi32>
    %cst_188 = arith.constant 0.000000e+00 : f32
    %576 = vector.broadcast %cst_188 : f32 to vector<8x8xf32>
    %577 = arith.select %575, %523, %576 : vector<8x8xi1>, vector<8x8xf32>
    %cst_189 = arith.constant dense<0.000000e+00> : vector<8xf32>
    %578 = vector.multi_reduction <add>, %577, %cst_189 [1] : vector<8x8xf32> to vector<8xf32>
    %579 = vector.shape_cast %578 : vector<8xf32> to vector<8x1xf32>
    %580 = tpu.concatenate %531, %537, %543, %549, %555, %561, %567, %573, %579 in 1 : vector<8x1xf32>, vector<8x1xf32>, vector<8x1xf32>, vector<8x1xf32>, vector<8x1xf32>, vector<8x1xf32>, vector<8x1xf32>, vector<8x1xf32>, vector<8x1xf32> -> vector<8x9xf32>
    %581 = arith.truncf %580 : vector<8x9xf32> to vector<8x9xbf16>
    %cst_190 = arith.constant dense<0.000000e+00> : vector<8x8xf32>
    %582 = tpu.matmul %581, %8, %cst_190 {dimension_numbers = #tpu.dot_dimension_numbers<[1], [0], [0], [1], [0, 0, 1, 1], [], []>} : vector<8x9xbf16>, vector<9x8xbf16>, vector<8x8xf32> -> vector<8x8xf32>
    %583 = arith.addf %525, %582 : vector<8x8xf32>
    %584 = tpu.concatenate %160, %301, %442, %583 in 1 : vector<8x8xf32>, vector<8x8xf32>, vector<8x8xf32>, vector<8x8xf32> -> vector<8x32xf32>
    %585 = arith.truncf %584 : vector<8x32xf32> to vector<8x32xbf16>
    %c0_191 = arith.constant 0 : index
    %c0_192 = arith.constant 0 : index
    %c0_193 = arith.constant 0 : index
    %586 = vector.load %arg7[%c0_191, %c0_192, %c0_193] : memref<1x8x32xbf16, #tpu.memory_space<vmem>>, vector<1x8x32xbf16>
    %587 = vector.shape_cast %586 : vector<1x8x32xbf16> to vector<8x32xbf16>
    %588 = vector.shape_cast %585 : vector<8x32xbf16> to vector<1x8x32xbf16>
    tpu.vector_store %arg7[%c0_191, %c0_192, %c0_193], %588 {strides = array<i32>} : memref<1x8x32xbf16, #tpu.memory_space<vmem>>, vector<1x8x32xbf16>,
    return
  }
  func.func @transform_0(%arg0: i32) -> (i32, i32, i32) {
    %c0_i32 = arith.constant 0 : i32
    %c0_i32_0 = arith.constant 0 : i32
    %c0_i32_1 = arith.constant 0 : i32
    return %arg0, %c0_i32, %c0_i32_0 : i32, i32, i32
  }
  func.func @transform_1(%arg0: i32) -> (i32, i32, i32) {
    %c0_i32 = arith.constant 0 : i32
    %c0_i32_0 = arith.constant 0 : i32
    %c0_i32_1 = arith.constant 0 : i32
    return %arg0, %c0_i32, %c0_i32_0 : i32, i32, i32
  }
  func.func @transform_2(%arg0: i32) -> (i32, i32, i32) {
    %c0_i32 = arith.constant 0 : i32
    %c0_i32_0 = arith.constant 0 : i32
    %c0_i32_1 = arith.constant 0 : i32
    return %arg0, %c0_i32, %c0_i32_0 : i32, i32, i32
  }
  func.func @transform_3(%arg0: i32) -> (i32, i32) {
    %c0_i32 = arith.constant 0 : i32
    %c0_i32_0 = arith.constant 0 : i32
    %c0_i32_1 = arith.constant 0 : i32
    return %c0_i32, %c0_i32_0 : i32, i32
  }
  func.func @transform_4(%arg0: i32) -> (i32, i32) {
    %c0_i32 = arith.constant 0 : i32
    %c0_i32_0 = arith.constant 0 : i32
    %c0_i32_1 = arith.constant 0 : i32
    return %c0_i32, %c0_i32_0 : i32, i32
  }
  func.func @transform_5(%arg0: i32) -> (i32, i32) {
    %c0_i32 = arith.constant 0 : i32
    %c0_i32_0 = arith.constant 0 : i32
    %c0_i32_1 = arith.constant 0 : i32
    return %c0_i32, %c0_i32_0 : i32, i32
  }
  func.func @transform_6(%arg0: i32) -> (i32, i32, i32) {
    %c0_i32 = arith.constant 0 : i32
    %c0_i32_0 = arith.constant 0 : i32
    %c0_i32_1 = arith.constant 0 : i32
    return %arg0, %c0_i32, %c0_i32_0 : i32, i32, i32
  }
}

</mosaic_0001>

<llo_original>
// kernel: tradition_mha_relative.1
$region0: #{tradition_mha_relative.1}
  #allocation0 [shape = 'u32[]', space=smem, size = 0x4, offset = 0x4, fixed_abs, tag = 'smem constant byte address 0x4 - core index']
  #allocation1 [shape = 'u32[144,128]{1,0:T(1,128)}', space=vmem, size = 0x12000, scoped, tag = 'internal scratch']
  %s0 = inlined_call_operand.vmem [shape: bf16[4,8,32], index: 0, kind: input, shape index: {}]
  %s1 = inlined_call_operand.vmem [shape: bf16[4,8,32], index: 1, kind: input, shape index: {}]
  %s2 = inlined_call_operand.vmem [shape: bf16[4,8,32], index: 2, kind: input, shape index: {}]
  %s3 = inlined_call_operand.vmem [shape: f32[4,8], index: 3, kind: input, shape index: {}]
  %s4 = inlined_call_operand.vmem [shape: bf16[8,9], index: 4, kind: input, shape index: {}]
  %s5 = inlined_call_operand.vmem [shape: bf16[9,8], index: 5, kind: input, shape index: {}]
  %s6 = inlined_call_operand.vmem [shape: bf16[4,8,32], index: 6, kind: output, shape index: {}]
  %s7 = sld [smem:[#allocation0]]
  $region57: #{tradition_mha_relative.1} parent=0
    _
  %s9 = ssub.s32 1, %s7
  %s10 = scalar_select 0, %s9, %s7
  loop: start=0, step=1, limit=6
  $region2: #{tradition_mha_relative.1} parent=0 // loop_pre_header
    _
  $region3: #{tradition_mha_relative.1} parent=0 // loop_header
    %s12 = sphi 0, %s16
    %p13 = scmp.ge.s32.totalorder %s12, 6
    %s22 = sphi 0, %s24
    %s25 = sphi 0, %s22
    %s26 = sphi 0, %s25
    %s42 = sphi 0, %s26
    %s48 = sphi 0, %s50
    %s51 = sphi 0, %s48
    %s52 = sphi 0, %s51
    %s68 = sphi 0, %s52
    %s74 = sphi 0, %s76
    %s77 = sphi 0, %s74
    %s78 = sphi 0, %s77
    %s94 = sphi 0, %s78
    %s98 = sphi 0, %s98
    %s100 = sphi 0, %s98
    %s101 = sphi 0, %s100
    %s115 = sphi 0, %s101
    %s119 = sphi 0, %s119
    %s121 = sphi 0, %s119
    %s122 = sphi 0, %s121
    %s136 = sphi 0, %s122
    %s140 = sphi 0, %s140
    %s142 = sphi 0, %s140
    %s143 = sphi 0, %s142
    %s157 = sphi 0, %s143
    %s163 = sphi 0, %s165
    %s166 = sphi 0, %s163
    %s167 = sphi 0, %s166
    %s183 = sphi 0, %s167
  $region4: #{tradition_mha_relative.1} parent=0 // loop_header_branch
    %15 = sbr.rel (%p13) target = $region8
  $region5: #{tradition_mha_relative.1} parent=0 // loop_body
    %s17 = ssub.s32 %s12, 1
    %s18 = ssub.s32 %s12, 2
    %s19 = sadd.s32 %s12, 1
    %s20 = ssub.s32 %s12, %s19
    %p21 = scmp.eq.s32.totalorder %s20, 0
    %s23 = sadd.s32 %s22, 1
    %s24 = scalar_select %p21, %s22, %s23
    %p27 = pneg %p21
    %p28 = scmp.eq.s32.totalorder %s12, 3
    %p29 = por %p27, %p28
    %p30 = scmp.ne.s32.totalorder %s22, %s25
    %p31 = scmp.eq.s32.totalorder %s12, 0
    %p32 = por %p30, %p31
    %p33 = scmp.ne.s32.totalorder %s22, %s25
    %p34 = scmp.eq.s32.totalorder %s17, 3
    %p35 = por %p33, %p34
    %p36 = scmp.ne.s32.totalorder %s25, %s26
    %p37 = scmp.eq.s32.totalorder %s17, 0
    %p38 = por %p36, %p37
    %p39 = scmp.ne.s32.totalorder %s25, %s26
    %p40 = scmp.eq.s32.totalorder %s18, 3
    %p41 = por %p39, %p40
    %p43 = scmp.ne.s32.totalorder %s26, %s42
    %p44 = scmp.eq.s32.totalorder %s18, 0
    %p45 = por %p43, %p44
    %s46 = ssub.s32 %s12, %s19
    %p47 = scmp.eq.s32.totalorder %s46, 0
    %s49 = sadd.s32 %s48, 1
    %s50 = scalar_select %p47, %s48, %s49
    %p53 = pneg %p47
    %p54 = scmp.eq.s32.totalorder %s12, 3
    %p55 = por %p53, %p54
    %p56 = scmp.ne.s32.totalorder %s48, %s51
    %p57 = scmp.eq.s32.totalorder %s12, 0
    %p58 = por %p56, %p57
    %p59 = scmp.ne.s32.totalorder %s48, %s51
    %p60 = scmp.eq.s32.totalorder %s17, 3
    %p61 = por %p59, %p60
    %p62 = scmp.ne.s32.totalorder %s51, %s52
    %p63 = scmp.eq.s32.totalorder %s17, 0
    %p64 = por %p62, %p63
    %p65 = scmp.ne.s32.totalorder %s51, %s52
    %p66 = scmp.eq.s32.totalorder %s18, 3
    %p67 = por %p65, %p66
    %p69 = scmp.ne.s32.totalorder %s52, %s68
    %p70 = scmp.eq.s32.totalorder %s18, 0
    %p71 = por %p69, %p70
    %s72 = ssub.s32 %s12, %s19
    %p73 = scmp.eq.s32.totalorder %s72, 0
    %s75 = sadd.s32 %s74, 1
    %s76 = scalar_select %p73, %s74, %s75
    %p79 = pneg %p73
    %p80 = scmp.eq.s32.totalorder %s12, 3
    %p81 = por %p79, %p80
    %p82 = scmp.ne.s32.totalorder %s74, %s77
    %p83 = scmp.eq.s32.totalorder %s12, 0
    %p84 = por %p82, %p83
    %p85 = scmp.ne.s32.totalorder %s74, %s77
    %p86 = scmp.eq.s32.totalorder %s17, 3
    %p87 = por %p85, %p86
    %p88 = scmp.ne.s32.totalorder %s77, %s78
    %p89 = scmp.eq.s32.totalorder %s17, 0
    %p90 = por %p88, %p89
    %p91 = scmp.ne.s32.totalorder %s77, %s78
    %p92 = scmp.eq.s32.totalorder %s18, 3
    %p93 = por %p91, %p92
    %p95 = scmp.ne.s32.totalorder %s78, %s94
    %p96 = scmp.eq.s32.totalorder %s18, 0
    %p97 = por %p95, %p96
    %s99 = sadd.s32 %s98, 1
    %p102 = scmp.eq.s32.totalorder %s12, 3
    %p103 = scmp.ne.s32.totalorder %s98, %s100
    %p104 = scmp.eq.s32.totalorder %s12, 0
    %p105 = por %p103, %p104
    %p106 = scmp.ne.s32.totalorder %s98, %s100
    %p107 = scmp.eq.s32.totalorder %s17, 3
    %p108 = por %p106, %p107
    %p109 = scmp.ne.s32.totalorder %s100, %s101
    %p110 = scmp.eq.s32.totalorder %s17, 0
    %p111 = por %p109, %p110
    %p112 = scmp.ne.s32.totalorder %s100, %s101
    %p113 = scmp.eq.s32.totalorder %s18, 3
    %p114 = por %p112, %p113
    %p116 = scmp.ne.s32.totalorder %s101, %s115
    %p117 = scmp.eq.s32.totalorder %s18, 0
    %p118 = por %p116, %p117
    %s120 = sadd.s32 %s119, 1
    %p123 = scmp.eq.s32.totalorder %s12, 3
    %p124 = scmp.ne.s32.totalorder %s119, %s121
    %p125 = scmp.eq.s32.totalorder %s12, 0
    %p126 = por %p124, %p125
    %p127 = scmp.ne.s32.totalorder %s119, %s121
    %p128 = scmp.eq.s32.totalorder %s17, 3
    %p129 = por %p127, %p128
    %p130 = scmp.ne.s32.totalorder %s121, %s122
    %p131 = scmp.eq.s32.totalorder %s17, 0
    %p132 = por %p130, %p131
    %p133 = scmp.ne.s32.totalorder %s121, %s122
    %p134 = scmp.eq.s32.totalorder %s18, 3
    %p135 = por %p133, %p134
    %p137 = scmp.ne.s32.totalorder %s122, %s136
    %p138 = scmp.eq.s32.totalorder %s18, 0
    %p139 = por %p137, %p138
    %s141 = sadd.s32 %s140, 1
    %p144 = scmp.eq.s32.totalorder %s12, 3
    %p145 = scmp.ne.s32.totalorder %s140, %s142
    %p146 = scmp.eq.s32.totalorder %s12, 0
    %p147 = por %p145, %p146
    %p148 = scmp.ne.s32.totalorder %s140, %s142
    %p149 = scmp.eq.s32.totalorder %s17, 3
    %p150 = por %p148, %p149
    %p151 = scmp.ne.s32.totalorder %s142, %s143
    %p152 = scmp.eq.s32.totalorder %s17, 0
    %p153 = por %p151, %p152
    %p154 = scmp.ne.s32.totalorder %s142, %s143
    %p155 = scmp.eq.s32.totalorder %s18, 3
    %p156 = por %p154, %p155
    %p158 = scmp.ne.s32.totalorder %s143, %s157
    %p159 = scmp.eq.s32.totalorder %s18, 0
    %p160 = por %p158, %p159
    %s161 = ssub.s32 %s12, %s19
    %p162 = scmp.eq.s32.totalorder %s161, 0
    %s164 = sadd.s32 %s163, 1
    %s165 = scalar_select %p162, %s163, %s164
    %p168 = pneg %p162
    %p169 = scmp.eq.s32.totalorder %s12, 3
    %p170 = por %p168, %p169
    %p171 = scmp.ne.s32.totalorder %s163, %s166
    %p172 = scmp.eq.s32.totalorder %s12, 0
    %p173 = por %p171, %p172
    %p174 = scmp.ne.s32.totalorder %s163, %s166
    %p175 = scmp.eq.s32.totalorder %s17, 3
    %p176 = por %p174, %p175
    %p177 = scmp.ne.s32.totalorder %s166, %s167
    %p178 = scmp.eq.s32.totalorder %s17, 0
    %p179 = por %p177, %p178
    %p180 = scmp.ne.s32.totalorder %s166, %s167
    %p181 = scmp.eq.s32.totalorder %s18, 3
    %p182 = por %p180, %p181
    %p184 = scmp.ne.s32.totalorder %s167, %s183
    %p185 = scmp.eq.s32.totalorder %s18, 0
    %p186 = por %p184, %p185
    %p187 = scmp.le.s32.totalorder 1, %s12
    %p188 = scmp.lt.s32.totalorder %s12, 5
    %p189 = pnand %p187, %p188
    %p190 = pneg %p189
    // Predicated region
    $region9: #{tradition_mha_relative.1} parent=5 // pred_check
      _
    $region10: #{tradition_mha_relative.1} parent=5 // pred_check_branch
      %192 = sbr.rel (%p189) target = $region12
    $region11: #{tradition_mha_relative.1} parent=5 // pred_region
      %s193 = ssub.s32 %s12, 1
      // Predicated region
      $region13: #{tradition_mha_relative.1} parent=11 // pred_check
        %p194 = pneg %p111
      $region14: #{tradition_mha_relative.1} parent=11 // pred_check_branch
        %196 = sbr.rel (%p194) target = $region16
      $region15: #{tradition_mha_relative.1} parent=11 // pred_region
        _
      $region16: #{tradition_mha_relative.1} parent=11 // pred_fallthru
        _
      // Predicated region
      $region17: #{tradition_mha_relative.1} parent=11 // pred_check
        %p197 = pneg %p132
      $region18: #{tradition_mha_relative.1} parent=11 // pred_check_branch
        %199 = sbr.rel (%p197) target = $region20
      $region19: #{tradition_mha_relative.1} parent=11 // pred_region
        _
      $region20: #{tradition_mha_relative.1} parent=11 // pred_fallthru
        _
      // Predicated region
      $region21: #{tradition_mha_relative.1} parent=11 // pred_check
        %p200 = pneg %p153
      $region22: #{tradition_mha_relative.1} parent=11 // pred_check_branch
        %202 = sbr.rel (%p200) target = $region24
      $region23: #{tradition_mha_relative.1} parent=11 // pred_region
        _
      $region24: #{tradition_mha_relative.1} parent=11 // pred_fallthru
        _
    $region12: #{tradition_mha_relative.1} parent=5 // pred_fallthru
      _
    %p203 = scmp.lt.s32.totalorder %s12, 4
    // Predicated region
    $region25: #{tradition_mha_relative.1} parent=5 // pred_check
      %p204 = pneg %p203
    $region26: #{tradition_mha_relative.1} parent=5 // pred_check_branch
      %206 = sbr.rel (%p204) target = $region28
    $region27: #{tradition_mha_relative.1} parent=5 // pred_region
      // Predicated region
      $region29: #{tradition_mha_relative.1} parent=27 // pred_check
        %p207 = pneg %p32
      $region30: #{tradition_mha_relative.1} parent=27 // pred_check_branch
        %209 = sbr.rel (%p207) target = $region32
      $region31: #{tradition_mha_relative.1} parent=27 // pred_region
        %p210 = scmp.lt.s32.totalorder %s12, 3
        %s211 = scalar_select %p210, %s12, 3
        %s212 = smul.addr %s211, 4
        %s213 = scalar_lea.vmem %s0, %s212
      $region32: #{tradition_mha_relative.1} parent=27 // pred_fallthru
        _
      // Predicated region
      $region33: #{tradition_mha_relative.1} parent=27 // pred_check
        %p214 = pneg %p58
      $region34: #{tradition_mha_relative.1} parent=27 // pred_check_branch
        %216 = sbr.rel (%p214) target = $region36
      $region35: #{tradition_mha_relative.1} parent=27 // pred_region
        %p217 = scmp.lt.s32.totalorder %s12, 3
        %s218 = scalar_select %p217, %s12, 3
        %s219 = smul.addr %s218, 4
        %s220 = scalar_lea.vmem %s1, %s219
      $region36: #{tradition_mha_relative.1} parent=27 // pred_fallthru
        _
      // Predicated region
      $region37: #{tradition_mha_relative.1} parent=27 // pred_check
        %p221 = pneg %p84
      $region38: #{tradition_mha_relative.1} parent=27 // pred_check_branch
        %223 = sbr.rel (%p221) target = $region40
      $region39: #{tradition_mha_relative.1} parent=27 // pred_region
        %p224 = scmp.lt.s32.totalorder %s12, 3
        %s225 = scalar_select %p224, %s12, 3
        %s226 = smul.addr %s225, 4
        %s227 = scalar_lea.vmem %s2, %s226
      $region40: #{tradition_mha_relative.1} parent=27 // pred_fallthru
        _
    $region28: #{tradition_mha_relative.1} parent=5 // pred_fallthru
      _
    %p228 = scmp.le.s32.totalorder 1, %s12
    %p229 = scmp.lt.s32.totalorder %s12, 5
    %p230 = pnand %p228, %p229
    %p231 = pneg %p230
    // Predicated region
    $region41: #{tradition_mha_relative.1} parent=5 // pred_check
      _
    $region42: #{tradition_mha_relative.1} parent=5 // pred_check_branch
      %233 = sbr.rel (%p230) target = $region44
    $region43: #{tradition_mha_relative.1} parent=5 // pred_region
      %s234 = ssub.s32 %s12, 1
      %p235 = scmp.lt.s32.totalorder %s17, 3
      %s236 = scalar_select %p235, %s17, 3
      %s237 = smul.addr %s236, 4
      %s238 = scalar_lea.vmem %s0, %s237
      %p239 = pneg %p38
      %p240 = pneg %p35
      %p241 = scmp.lt.s32.totalorder %s17, 3
      %s242 = scalar_select %p241, %s17, 3
      %s243 = smul.addr %s242, 4
      %s244 = scalar_lea.vmem %s1, %s243
      %p245 = pneg %p64
      %p246 = pneg %p61
      %p247 = scmp.lt.s32.totalorder %s17, 3
      %s248 = scalar_select %p247, %s17, 3
      %s249 = smul.addr %s248, 4
      %s250 = scalar_lea.vmem %s2, %s249
      %p251 = pneg %p90
      %p252 = pneg %p87
      %p253 = pneg %p111
      %p254 = pneg %p108
      %p255 = pneg %p132
      %p256 = pneg %p129
      %p257 = pneg %p153
      %p258 = pneg %p150
      %p259 = pneg %p179
      %p260 = pneg %p176
      %p261 = scmp.lt.s32.totalorder %s17, 3
      %s262 = scalar_select %p261, %s17, 3
      %s263 = smul.addr %s262, 4
      %s264 = scalar_lea.vmem %s6, %s263
      %p265 = scmp.lt.s32.totalorder %s17, 3
      %s266 = scalar_select %p265, %s17, 3
      %s267 = smul.addr %s266, 4
      %s268 = scalar_lea.vmem %s0, %s267
      %p269 = scmp.lt.s32.totalorder %s17, 3
      %s270 = scalar_select %p269, %s17, 3
      %s271 = smul.addr %s270, 4
      %s272 = scalar_lea.vmem %s1, %s271
      %p273 = scmp.lt.s32.totalorder %s17, 3
      %s274 = scalar_select %p273, %s17, 3
      %s275 = smul.addr %s274, 4
      %s276 = scalar_lea.vmem %s2, %s275
      %p277 = scmp.lt.s32.totalorder %s17, 3
      %s278 = scalar_select %p277, %s17, 3
      %s279 = smul.addr %s278, 4
      %s280 = scalar_lea.vmem %s6, %s279
      %v282 = vld [vmem:[%s268] sm:$0xf]
      %v283 = vld [vmem:[%s272] sm:$0xf]
      %v284 = vld [vmem:[%s276] sm:$0xf]
      %v285 = vld [vmem:[%s3] sm:$0xf]
      %v286 = vld [vmem:[%s4] sm:$0xf]
      %v287 = vld [vmem:[%s5] sm:$0xf]
      %v288 = vld [vmem:[%s5 + $0x4] sm:$0x1]
      %v289 = vlaneseq
      %v290 = vshrl.u32 %v289, 7
      %v291 = vlaneseq
      %v292 = vand.u32 %v291, 127
      %v293 = vsub.s32 %v292, %v290
      %vm294 = vcmp.gt.s32.totalorder %v293, 4294967292
      %v295 = vsel %vm294, %v293, 4294967292
      %vm296 = vcmp.lt.s32.totalorder %v295, 4
      %v297 = vsel %vm296, %v295, 4
      %v298 = vadd.s32 %v297, 4
      %vm299 = vcmask 64512
      %v301 = vsel %vm299, %v282, 0
      %vm303 = vcmask 1043456
      %v305 = vsel %vm303, %v286, 0
      %307 = vmatprep.subr.bf16.mxu0 0
      %308 = vmatpush1.bf16.msra.mxu0 %v305
      %309 = vmatprep.subr.bf16.mxu0 0
      %310 = vmatpush1.bf16.msra.mxu0 0
      %311 = vmatprep.subr.bf16.mxu0 0
      %312 = vmatpush1.bf16.msra.mxu0 0
      %313 = vmatprep.subr.bf16.mxu0 0
      %314 = vmatpush1.bf16.msra.mxu0 0
      %315 = vmatprep.subr.bf16.mxu0 0
      %316 = vmatpush1.bf16.msra.mxu0 0
      %317 = vmatprep.subr.bf16.mxu0 0
      %318 = vmatpush1.bf16.msra.mxu0 0
      %319 = vmatprep.subr.bf16.mxu0 0
      %320 = vmatpush1.bf16.msra.mxu0 0
      %321 = vmatprep.subr.bf16.mxu0 0
      %322 = vmatpush1.bf16.msra.mxu0 0
      %323 = vmatprep.subr.bf16.mxu0 0
      %324 = vmatpush1.bf16.msra.mxu0 0
      %325 = vmatprep.subr.bf16.mxu0 0
      %326 = vmatpush1.bf16.msra.mxu0 0
      %327 = vmatprep.subr.bf16.mxu0 0
      %328 = vmatpush1.bf16.msra.mxu0 0
      %329 = vmatprep.subr.bf16.mxu0 0
      %330 = vmatpush1.bf16.msra.mxu0 0
      %331 = vmatprep.subr.bf16.mxu0 0
      %332 = vmatpush1.bf16.msra.mxu0 0
      %333 = vmatprep.subr.bf16.mxu0 0
      %334 = vmatpush1.bf16.msra.mxu0 0
      %335 = vmatprep.subr.bf16.mxu0 0
      %336 = vmatpush1.bf16.msra.mxu0 0
      %337 = vmatprep.subr.bf16.mxu0 0
      %338 = vmatpush1.bf16.msra.mxu0 0
      %339 = vmatprep.mubr.bf16.mxu0 0
      %340 = vmatmul.mubr.bf16.gmra.mrb[0].mxu0 %v301
      %v341 = vpop.f32.mrb[0].mxu0
      %v342 = vadd.f32 0.0, %v341
      %v343 = vpop.f32.mrb[0].mxu0
      %v344 = vpop.f32.mrb[0].mxu0
      %v345 = vpop.f32.mrb[0].mxu0
      %346 = vdwg.mxu0
      %vm347 = vcmp.eq.s32.totalorder %v298, 0
      %349 = vset.pattern.permute.xlu0 0
      %350 = vperm.xlu0 %349, %v342
      %v351 = vpop.permute.xlu0 %350
      %v353 = vsel %vm347, %v351, 0.0
      %vm354 = vcmp.eq.s32.totalorder %v298, 1
      %355 = vset.pattern.permute.xlu0 1
      %356 = vperm.xlu0 %355, %v342
      %v357 = vpop.permute.xlu0 %356
      %v359 = vsel %vm354, %v357, %v353
      %vm360 = vcmp.eq.s32.totalorder %v298, 2
      %361 = vset.pattern.permute.xlu0 2
      %362 = vperm.xlu0 %361, %v342
      %v363 = vpop.permute.xlu0 %362
      %v365 = vsel %vm360, %v363, %v359
      %vm366 = vcmp.eq.s32.totalorder %v298, 3
      %367 = vset.pattern.permute.xlu0 3
      %368 = vperm.xlu0 %367, %v342
      %v369 = vpop.permute.xlu0 %368
      %v371 = vsel %vm366, %v369, %v365
      %vm372 = vcmp.eq.s32.totalorder %v298, 4
      %373 = vset.pattern.permute.xlu0 4
      %374 = vperm.xlu0 %373, %v342
      %v375 = vpop.permute.xlu0 %374
      %v377 = vsel %vm372, %v375, %v371
      %vm378 = vcmp.eq.s32.totalorder %v298, 5
      %379 = vset.pattern.permute.xlu0 5
      %380 = vperm.xlu0 %379, %v342
      %v381 = vpop.permute.xlu0 %380
      %v383 = vsel %vm378, %v381, %v377
      %vm384 = vcmp.eq.s32.totalorder %v298, 6
      %385 = vset.pattern.permute.xlu0 6
      %386 = vperm.xlu0 %385, %v342
      %v387 = vpop.permute.xlu0 %386
      %v389 = vsel %vm384, %v387, %v383
      %vm390 = vcmp.eq.s32.totalorder %v298, 7
      %391 = vset.pattern.permute.xlu0 7
      %392 = vperm.xlu0 %391, %v342
      %v393 = vpop.permute.xlu0 %392
      %v395 = vsel %vm390, %v393, %v389
      %vm396 = vcmp.eq.s32.totalorder %v298, 8
      %397 = vset.pattern.permute.xlu0 8
      %398 = vperm.xlu0 %397, %v342
      %v399 = vpop.permute.xlu0 %398
      %v401 = vsel %vm396, %v399, %v395
      %v403 = vsel %vm299, %v283, 0
      %405 = vmatprep.subr.bf16.mxu0 0
      %406 = vmatpush1.bf16.xpose.msra.mxu0 %v403
      %407 = vmatprep.subr.bf16.mxu0 0
      %408 = vmatpush1.bf16.xpose.msra.mxu0 0
      %409 = vmatprep.subr.bf16.mxu0 0
      %410 = vmatpush1.bf16.xpose.msra.mxu0 0
      %411 = vmatprep.subr.bf16.mxu0 0
      %412 = vmatpush1.bf16.xpose.msra.mxu0 0
      %413 = vmatprep.subr.bf16.mxu0 0
      %414 = vmatpush1.bf16.xpose.msra.mxu0 0
      %415 = vmatprep.subr.bf16.mxu0 0
      %416 = vmatpush1.bf16.xpose.msra.mxu0 0
      %417 = vmatprep.subr.bf16.mxu0 0
      %418 = vmatpush1.bf16.xpose.msra.mxu0 0
      %419 = vmatprep.subr.bf16.mxu0 0
      %420 = vmatpush1.bf16.xpose.msra.mxu0 0
      %421 = vmatprep.subr.bf16.mxu0 0
      %422 = vmatpush1.bf16.xpose.msra.mxu0 0
      %423 = vmatprep.subr.bf16.mxu0 0
      %424 = vmatpush1.bf16.xpose.msra.mxu0 0
      %425 = vmatprep.subr.bf16.mxu0 0
      %426 = vmatpush1.bf16.xpose.msra.mxu0 0
      %427 = vmatprep.subr.bf16.mxu0 0
      %428 = vmatpush1.bf16.xpose.msra.mxu0 0
      %429 = vmatprep.subr.bf16.mxu0 0
      %430 = vmatpush1.bf16.xpose.msra.mxu0 0
      %431 = vmatprep.subr.bf16.mxu0 0
      %432 = vmatpush1.bf16.xpose.msra.mxu0 0
      %433 = vmatprep.subr.bf16.mxu0 0
      %434 = vmatpush1.bf16.xpose.msra.mxu0 0
      %435 = vmatprep.subr.bf16.mxu0 0
      %436 = vmatpush1.bf16.xpose.msra.mxu0 0
      %437 = vmatprep.mubr.bf16.mxu0 0
      %438 = vmatmul.mubr.bf16.gmra.mrb[0].mxu0 %v301
      %v439 = vpop.f32.mrb[0].mxu0
      %v440 = vadd.f32 %v401, %v439
      %v441 = vpop.f32.mrb[0].mxu0
      %v442 = vpop.f32.mrb[0].mxu0
      %v443 = vpop.f32.mrb[0].mxu0
      %444 = vdwg.mxu0
      %v445 = vlaneseq
      %v446 = vshrl.u32 %v445, 7
      %v447 = vsub.s32 0, %v446
      %v448 = vrot.slane %v285, %v447
      %v449 = vadd.f32 %v440, %v448
      %v450 = vsel %vm299, %v449, -inf
      %451 = vmax.xlane.f32.xlu0 %v450
      %v452 = vpop.xlane.xlu0 %451
      %v453 = vsub.f32 %v449, %v452
      %v454 = vmul.f32 %v453, 1.442695
      %v455 = vpow.pop %v454
      %v456 = vsel %vm299, %v455, 0.0
      %457 = vadd.xlane.f32.xlu0 %v456
      %v458 = vpop.xlane.xlu0 %457
      %v459 = vrcp.pop %v458
      %v460 = vmul.f32 %v455, %v459
      %vm461 = vcmp.eq.f32.partialorder %v285, 0.0
      %v462 = vsel %vm461, 1.0, 0.0
      %v463 = vlaneseq
      %v464 = vshrl.u32 %v463, 7
      %v465 = vsub.s32 0, %v464
      %v466 = vrot.slane %v462, %v465
      %v467 = vmul.f32 %v460, %v466
      %v468 = vpack.c.bf16 %v467, %v467
      %v469 = vsel %vm347, %v467, 0.0
      %v470 = vsel %vm299, %v469, 0.0
      %471 = vadd.xlane.f32.xlu0 %v470
      %v472 = vpop.xlane.xlu0 %471
      %v473 = vsel %vm354, %v467, 0.0
      %v474 = vsel %vm299, %v473, 0.0
      %475 = vadd.xlane.f32.xlu0 %v474
      %v476 = vpop.xlane.xlu0 %475
      %v477 = vsel %vm360, %v467, 0.0
      %v478 = vsel %vm299, %v477, 0.0
      %479 = vadd.xlane.f32.xlu0 %v478
      %v480 = vpop.xlane.xlu0 %479
      %v481 = vsel %vm366, %v467, 0.0
      %v482 = vsel %vm299, %v481, 0.0
      %483 = vadd.xlane.f32.xlu0 %v482
      %v484 = vpop.xlane.xlu0 %483
      %v485 = vsel %vm372, %v467, 0.0
      %v486 = vsel %vm299, %v485, 0.0
      %487 = vadd.xlane.f32.xlu0 %v486
      %v488 = vpop.xlane.xlu0 %487
      %v489 = vsel %vm378, %v467, 0.0
      %v490 = vsel %vm299, %v489, 0.0
      %491 = vadd.xlane.f32.xlu0 %v490
      %v492 = vpop.xlane.xlu0 %491
      %v493 = vsel %vm384, %v467, 0.0
      %v494 = vsel %vm299, %v493, 0.0
      %495 = vadd.xlane.f32.xlu0 %v494
      %v496 = vpop.xlane.xlu0 %495
      %v497 = vsel %vm390, %v467, 0.0
      %v498 = vsel %vm299, %v497, 0.0
      %499 = vadd.xlane.f32.xlu0 %v498
      %v500 = vpop.xlane.xlu0 %499
      %v501 = vsel %vm396, %v467, 0.0
      %v502 = vsel %vm299, %v501, 0.0
      %503 = vadd.xlane.f32.xlu0 %v502
      %v504 = vpop.xlane.xlu0 %503
      %vm505 = vcmask 7168
      %v506 = vsel %vm505, %v472, %v476
      %vm507 = vcmask 15360
      %v508 = vsel %vm507, %v506, %v480
      %vm509 = vcmask 23552
      %v510 = vsel %vm509, %v508, %v484
      %vm511 = vcmask 31744
      %v512 = vsel %vm511, %v510, %v488
      %vm513 = vcmask 39936
      %v514 = vsel %vm513, %v512, %v492
      %vm515 = vcmask 48128
      %v516 = vsel %vm515, %v514, %v496
      %vm517 = vcmask 56320
      %v518 = vsel %vm517, %v516, %v500
      %v519 = vsel %vm299, %v518, %v504
      %v520 = vpack.c.bf16 %v519, %v519
      %v523 = vunpack.c.l.b16 %v287
      %v524 = vunpack.c.l.b16 %v288
      %v525 = vpack.c.b16 %v524, %v523
      %vm526 = vcmask 72704
      %v528 = vsel %vm526, %v520, 0
      %vm530 = vcmask 1044480
      %v531 = vsel %vm303, 4294967295, 65535
      %v532 = vsel %vm530, %v531, 0
      %v534 = vand.u32 %v525, %v532
      %536 = vmatprep.subr.bf16.mxu0 0
      %537 = vmatpush1.bf16.msra.mxu0 %v534
      %538 = vmatprep.subr.bf16.mxu0 0
      %539 = vmatpush1.bf16.msra.mxu0 0
      %540 = vmatprep.subr.bf16.mxu0 0
      %541 = vmatpush1.bf16.msra.mxu0 0
      %542 = vmatprep.subr.bf16.mxu0 0
      %543 = vmatpush1.bf16.msra.mxu0 0
      %544 = vmatprep.subr.bf16.mxu0 0
      %545 = vmatpush1.bf16.msra.mxu0 0
      %546 = vmatprep.subr.bf16.mxu0 0
      %547 = vmatpush1.bf16.msra.mxu0 0
      %548 = vmatprep.subr.bf16.mxu0 0
      %549 = vmatpush1.bf16.msra.mxu0 0
      %550 = vmatprep.subr.bf16.mxu0 0
      %551 = vmatpush1.bf16.msra.mxu0 0
      %552 = vmatprep.subr.bf16.mxu0 0
      %553 = vmatpush1.bf16.msra.mxu0 0
      %554 = vmatprep.subr.bf16.mxu0 0
      %555 = vmatpush1.bf16.msra.mxu0 0
      %556 = vmatprep.subr.bf16.mxu0 0
      %557 = vmatpush1.bf16.msra.mxu0 0
      %558 = vmatprep.subr.bf16.mxu0 0
      %559 = vmatpush1.bf16.msra.mxu0 0
      %560 = vmatprep.subr.bf16.mxu0 0
      %561 = vmatpush1.bf16.msra.mxu0 0
      %562 = vmatprep.subr.bf16.mxu0 0
      %563 = vmatpush1.bf16.msra.mxu0 0
      %564 = vmatprep.subr.bf16.mxu0 0
      %565 = vmatpush1.bf16.msra.mxu0 0
      %566 = vmatprep.subr.bf16.mxu0 0
      %567 = vmatpush1.bf16.msra.mxu0 0
      %568 = vmatprep.mubr.bf16.mxu0 0
      %569 = vmatmul.mubr.bf16.gmra.mrb[0].mxu0 %v528
      %v570 = vpop.f32.mrb[0].mxu0
      %v571 = vadd.f32 0.0, %v570
      %v572 = vpop.f32.mrb[0].mxu0
      %v573 = vpop.f32.mrb[0].mxu0
      %v574 = vpop.f32.mrb[0].mxu0
      %575 = vdwg.mxu0
      %v577 = vsel %vm299, %v468, 0
      %v580 = vsel %vm303, %v284, 0
      %582 = vmatprep.subr.bf16.mxu0 0
      %583 = vmatpush1.bf16.msra.mxu0 %v580
      %584 = vmatprep.subr.bf16.mxu0 0
      %585 = vmatpush1.bf16.msra.mxu0 0
      %586 = vmatprep.subr.bf16.mxu0 0
      %587 = vmatpush1.bf16.msra.mxu0 0
      %588 = vmatprep.subr.bf16.mxu0 0
      %589 = vmatpush1.bf16.msra.mxu0 0
      %590 = vmatprep.subr.bf16.mxu0 0
      %591 = vmatpush1.bf16.msra.mxu0 0
      %592 = vmatprep.subr.bf16.mxu0 0
      %593 = vmatpush1.bf16.msra.mxu0 0
      %594 = vmatprep.subr.bf16.mxu0 0
      %595 = vmatpush1.bf16.msra.mxu0 0
      %596 = vmatprep.subr.bf16.mxu0 0
      %597 = vmatpush1.bf16.msra.mxu0 0
      %598 = vmatprep.subr.bf16.mxu0 0
      %599 = vmatpush1.bf16.msra.mxu0 0
      %600 = vmatprep.subr.bf16.mxu0 0
      %601 = vmatpush1.bf16.msra.mxu0 0
      %602 = vmatprep.subr.bf16.mxu0 0
      %603 = vmatpush1.bf16.msra.mxu0 0
      %604 = vmatprep.subr.bf16.mxu0 0
      %605 = vmatpush1.bf16.msra.mxu0 0
      %606 = vmatprep.subr.bf16.mxu0 0
      %607 = vmatpush1.bf16.msra.mxu0 0
      %608 = vmatprep.subr.bf16.mxu0 0
      %609 = vmatpush1.bf16.msra.mxu0 0
      %610 = vmatprep.subr.bf16.mxu0 0
      %611 = vmatpush1.bf16.msra.mxu0 0
      %612 = vmatprep.subr.bf16.mxu0 0
      %613 = vmatpush1.bf16.msra.mxu0 0
      %614 = vmatprep.mubr.bf16.mxu0 0
      %615 = vmatmul.mubr.bf16.gmra.mrb[0].mxu0 %v577
      %v616 = vpop.f32.mrb[0].mxu0
      %v617 = vadd.f32 %v571, %v616
      %v618 = vpop.f32.mrb[0].mxu0
      %v619 = vpop.f32.mrb[0].mxu0
      %v620 = vpop.f32.mrb[0].mxu0
      %621 = vdwg.mxu0
      %v623 = vunpack.c.l.b16 %v282
      %v624 = vpack.c.b16 %v623, %v623
      %625 = vrot.lane.b32.xlu0 %v624, 120
      %v626 = vpop.permute.xlu0 %625
      %v628 = vsel %vm299, %v626, 0
      %630 = vmatprep.subr.bf16.mxu0 0
      %631 = vmatpush1.bf16.msra.mxu0 %v305
      %632 = vmatprep.subr.bf16.mxu0 0
      %633 = vmatpush1.bf16.msra.mxu0 0
      %634 = vmatprep.subr.bf16.mxu0 0
      %635 = vmatpush1.bf16.msra.mxu0 0
      %636 = vmatprep.subr.bf16.mxu0 0
      %637 = vmatpush1.bf16.msra.mxu0 0
      %638 = vmatprep.subr.bf16.mxu0 0
      %639 = vmatpush1.bf16.msra.mxu0 0
      %640 = vmatprep.subr.bf16.mxu0 0
      %641 = vmatpush1.bf16.msra.mxu0 0
      %642 = vmatprep.subr.bf16.mxu0 0
      %643 = vmatpush1.bf16.msra.mxu0 0
      %644 = vmatprep.subr.bf16.mxu0 0
      %645 = vmatpush1.bf16.msra.mxu0 0
      %646 = vmatprep.subr.bf16.mxu0 0
      %647 = vmatpush1.bf16.msra.mxu0 0
      %648 = vmatprep.subr.bf16.mxu0 0
      %649 = vmatpush1.bf16.msra.mxu0 0
      %650 = vmatprep.subr.bf16.mxu0 0
      %651 = vmatpush1.bf16.msra.mxu0 0
      %652 = vmatprep.subr.bf16.mxu0 0
      %653 = vmatpush1.bf16.msra.mxu0 0
      %654 = vmatprep.subr.bf16.mxu0 0
      %655 = vmatpush1.bf16.msra.mxu0 0
      %656 = vmatprep.subr.bf16.mxu0 0
      %657 = vmatpush1.bf16.msra.mxu0 0
      %658 = vmatprep.subr.bf16.mxu0 0
      %659 = vmatpush1.bf16.msra.mxu0 0
      %660 = vmatprep.subr.bf16.mxu0 0
      %661 = vmatpush1.bf16.msra.mxu0 0
      %662 = vmatprep.mubr.bf16.mxu0 0
      %663 = vmatmul.mubr.bf16.gmra.mrb[0].mxu0 %v628
      %v664 = vpop.f32.mrb[0].mxu0
      %v665 = vadd.f32 0.0, %v664
      %v666 = vpop.f32.mrb[0].mxu0
      %v667 = vpop.f32.mrb[0].mxu0
      %v668 = vpop.f32.mrb[0].mxu0
      %669 = vdwg.mxu0
      %671 = vset.pattern.permute.xlu0 0
      %672 = vperm.xlu0 %671, %v665
      %v673 = vpop.permute.xlu0 %672
      %v675 = vsel %vm347, %v673, 0.0
      %676 = vset.pattern.permute.xlu0 1
      %677 = vperm.xlu0 %676, %v665
      %v678 = vpop.permute.xlu0 %677
      %v680 = vsel %vm354, %v678, %v675
      %681 = vset.pattern.permute.xlu0 2
      %682 = vperm.xlu0 %681, %v665
      %v683 = vpop.permute.xlu0 %682
      %v685 = vsel %vm360, %v683, %v680
      %686 = vset.pattern.permute.xlu0 3
      %687 = vperm.xlu0 %686, %v665
      %v688 = vpop.permute.xlu0 %687
      %v690 = vsel %vm366, %v688, %v685
      %691 = vset.pattern.permute.xlu0 4
      %692 = vperm.xlu0 %691, %v665
      %v693 = vpop.permute.xlu0 %692
      %v695 = vsel %vm372, %v693, %v690
      %696 = vset.pattern.permute.xlu0 5
      %697 = vperm.xlu0 %696, %v665
      %v698 = vpop.permute.xlu0 %697
      %v700 = vsel %vm378, %v698, %v695
      %701 = vset.pattern.permute.xlu0 6
      %702 = vperm.xlu0 %701, %v665
      %v703 = vpop.permute.xlu0 %702
      %v705 = vsel %vm384, %v703, %v700
      %706 = vset.pattern.permute.xlu0 7
      %707 = vperm.xlu0 %706, %v665
      %v708 = vpop.permute.xlu0 %707
      %v710 = vsel %vm390, %v708, %v705
      %711 = vset.pattern.permute.xlu0 8
      %712 = vperm.xlu0 %711, %v665
      %v713 = vpop.permute.xlu0 %712
      %v715 = vsel %vm396, %v713, %v710
      %v717 = vunpack.c.l.b16 %v283
      %v718 = vpack.c.b16 %v717, %v717
      %719 = vrot.lane.b32.xlu0 %v718, 120
      %v720 = vpop.permute.xlu0 %719
      %v722 = vsel %vm299, %v720, 0
      %724 = vmatprep.subr.bf16.mxu0 0
      %725 = vmatpush1.bf16.xpose.msra.mxu0 %v722
      %726 = vmatprep.subr.bf16.mxu0 0
      %727 = vmatpush1.bf16.xpose.msra.mxu0 0
      %728 = vmatprep.subr.bf16.mxu0 0
      %729 = vmatpush1.bf16.xpose.msra.mxu0 0
      %730 = vmatprep.subr.bf16.mxu0 0
      %731 = vmatpush1.bf16.xpose.msra.mxu0 0
      %732 = vmatprep.subr.bf16.mxu0 0
      %733 = vmatpush1.bf16.xpose.msra.mxu0 0
      %734 = vmatprep.subr.bf16.mxu0 0
      %735 = vmatpush1.bf16.xpose.msra.mxu0 0
      %736 = vmatprep.subr.bf16.mxu0 0
      %737 = vmatpush1.bf16.xpose.msra.mxu0 0
      %738 = vmatprep.subr.bf16.mxu0 0
      %739 = vmatpush1.bf16.xpose.msra.mxu0 0
      %740 = vmatprep.subr.bf16.mxu0 0
      %741 = vmatpush1.bf16.xpose.msra.mxu0 0
      %742 = vmatprep.subr.bf16.mxu0 0
      %743 = vmatpush1.bf16.xpose.msra.mxu0 0
      %744 = vmatprep.subr.bf16.mxu0 0
      %745 = vmatpush1.bf16.xpose.msra.mxu0 0
      %746 = vmatprep.subr.bf16.mxu0 0
      %747 = vmatpush1.bf16.xpose.msra.mxu0 0
      %748 = vmatprep.subr.bf16.mxu0 0
      %749 = vmatpush1.bf16.xpose.msra.mxu0 0
      %750 = vmatprep.subr.bf16.mxu0 0
      %751 = vmatpush1.bf16.xpose.msra.mxu0 0
      %752 = vmatprep.subr.bf16.mxu0 0
      %753 = vmatpush1.bf16.xpose.msra.mxu0 0
      %754 = vmatprep.subr.bf16.mxu0 0
      %755 = vmatpush1.bf16.xpose.msra.mxu0 0
      %756 = vmatprep.mubr.bf16.mxu0 0
      %757 = vmatmul.mubr.bf16.gmra.mrb[0].mxu0 %v628
      %v758 = vpop.f32.mrb[0].mxu0
      %v759 = vadd.f32 %v715, %v758
      %v760 = vpop.f32.mrb[0].mxu0
      %v761 = vpop.f32.mrb[0].mxu0
      %v762 = vpop.f32.mrb[0].mxu0
      %763 = vdwg.mxu0
      %v764 = vlaneseq
      %v765 = vshrl.u32 %v764, 7
      %v766 = vsub.s32 1, %v765
      %v767 = vrot.slane %v285, %v766
      %v768 = vadd.f32 %v759, %v767
      %v769 = vsel %vm299, %v768, -inf
      %770 = vmax.xlane.f32.xlu0 %v769
      %v771 = vpop.xlane.xlu0 %770
      %v772 = vsub.f32 %v768, %v771
      %v773 = vmul.f32 %v772, 1.442695
      %v774 = vpow.pop %v773
      %v775 = vsel %vm299, %v774, 0.0
      %776 = vadd.xlane.f32.xlu0 %v775
      %v777 = vpop.xlane.xlu0 %776
      %v778 = vrcp.pop %v777
      %v779 = vmul.f32 %v774, %v778
      %v780 = vlaneseq
      %v781 = vshrl.u32 %v780, 7
      %v782 = vsub.s32 1, %v781
      %v783 = vrot.slane %v462, %v782
      %v784 = vmul.f32 %v779, %v783
      %v785 = vpack.c.bf16 %v784, %v784
      %v786 = vsel %vm347, %v784, 0.0
      %v787 = vsel %vm299, %v786, 0.0
      %788 = vadd.xlane.f32.xlu0 %v787
      %v789 = vpop.xlane.xlu0 %788
      %v790 = vsel %vm354, %v784, 0.0
      %v791 = vsel %vm299, %v790, 0.0
      %792 = vadd.xlane.f32.xlu0 %v791
      %v793 = vpop.xlane.xlu0 %792
      %v794 = vsel %vm360, %v784, 0.0
      %v795 = vsel %vm299, %v794, 0.0
      %796 = vadd.xlane.f32.xlu0 %v795
      %v797 = vpop.xlane.xlu0 %796
      %v798 = vsel %vm366, %v784, 0.0
      %v799 = vsel %vm299, %v798, 0.0
      %800 = vadd.xlane.f32.xlu0 %v799
      %v801 = vpop.xlane.xlu0 %800
      %v802 = vsel %vm372, %v784, 0.0
      %v803 = vsel %vm299, %v802, 0.0
      %804 = vadd.xlane.f32.xlu0 %v803
      %v805 = vpop.xlane.xlu0 %804
      %v806 = vsel %vm378, %v784, 0.0
      %v807 = vsel %vm299, %v806, 0.0
      %808 = vadd.xlane.f32.xlu0 %v807
      %v809 = vpop.xlane.xlu0 %808
      %v810 = vsel %vm384, %v784, 0.0
      %v811 = vsel %vm299, %v810, 0.0
      %812 = vadd.xlane.f32.xlu0 %v811
      %v813 = vpop.xlane.xlu0 %812
      %v814 = vsel %vm390, %v784, 0.0
      %v815 = vsel %vm299, %v814, 0.0
      %816 = vadd.xlane.f32.xlu0 %v815
      %v817 = vpop.xlane.xlu0 %816
      %v818 = vsel %vm396, %v784, 0.0
      %v819 = vsel %vm299, %v818, 0.0
      %820 = vadd.xlane.f32.xlu0 %v819
      %v821 = vpop.xlane.xlu0 %820
      %v822 = vsel %vm505, %v789, %v793
      %v823 = vsel %vm507, %v822, %v797
      %v824 = vsel %vm509, %v823, %v801
      %v825 = vsel %vm511, %v824, %v805
      %v826 = vsel %vm513, %v825, %v809
      %v827 = vsel %vm515, %v826, %v813
      %v828 = vsel %vm517, %v827, %v817
      %v829 = vsel %vm299, %v828, %v821
      %v830 = vpack.c.bf16 %v829, %v829
      %v832 = vsel %vm526, %v830, 0
      %834 = vmatprep.subr.bf16.mxu0 0
      %835 = vmatpush1.bf16.msra.mxu0 %v534
      %836 = vmatprep.subr.bf16.mxu0 0
      %837 = vmatpush1.bf16.msra.mxu0 0
      %838 = vmatprep.subr.bf16.mxu0 0
      %839 = vmatpush1.bf16.msra.mxu0 0
      %840 = vmatprep.subr.bf16.mxu0 0
      %841 = vmatpush1.bf16.msra.mxu0 0
      %842 = vmatprep.subr.bf16.mxu0 0
      %843 = vmatpush1.bf16.msra.mxu0 0
      %844 = vmatprep.subr.bf16.mxu0 0
      %845 = vmatpush1.bf16.msra.mxu0 0
      %846 = vmatprep.subr.bf16.mxu0 0
      %847 = vmatpush1.bf16.msra.mxu0 0
      %848 = vmatprep.subr.bf16.mxu0 0
      %849 = vmatpush1.bf16.msra.mxu0 0
      %850 = vmatprep.subr.bf16.mxu0 0
      %851 = vmatpush1.bf16.msra.mxu0 0
      %852 = vmatprep.subr.bf16.mxu0 0
      %853 = vmatpush1.bf16.msra.mxu0 0
      %854 = vmatprep.subr.bf16.mxu0 0
      %855 = vmatpush1.bf16.msra.mxu0 0
      %856 = vmatprep.subr.bf16.mxu0 0
      %857 = vmatpush1.bf16.msra.mxu0 0
      %858 = vmatprep.subr.bf16.mxu0 0
      %859 = vmatpush1.bf16.msra.mxu0 0
      %860 = vmatprep.subr.bf16.mxu0 0
      %861 = vmatpush1.bf16.msra.mxu0 0
      %862 = vmatprep.subr.bf16.mxu0 0
      %863 = vmatpush1.bf16.msra.mxu0 0
      %864 = vmatprep.subr.bf16.mxu0 0
      %865 = vmatpush1.bf16.msra.mxu0 0
      %866 = vmatprep.mubr.bf16.mxu0 0
      %867 = vmatmul.mubr.bf16.gmra.mrb[0].mxu0 %v832
      %v868 = vpop.f32.mrb[0].mxu0
      %v869 = vadd.f32 0.0, %v868
      %v870 = vpop.f32.mrb[0].mxu0
      %v871 = vpop.f32.mrb[0].mxu0
      %v872 = vpop.f32.mrb[0].mxu0
      %873 = vdwg.mxu0
      %v875 = vunpack.c.l.b16 %v284
      %v876 = vpack.c.b16 %v875, %v875
      %877 = vrot.lane.b32.xlu0 %v876, 120
      %v878 = vpop.permute.xlu0 %877
      %v880 = vsel %vm299, %v785, 0
      %v883 = vsel %vm303, %v878, 0
      %885 = vmatprep.subr.bf16.mxu0 0
      %886 = vmatpush1.bf16.msra.mxu0 %v883
      %887 = vmatprep.subr.bf16.mxu0 0
      %888 = vmatpush1.bf16.msra.mxu0 0
      %889 = vmatprep.subr.bf16.mxu0 0
      %890 = vmatpush1.bf16.msra.mxu0 0
      %891 = vmatprep.subr.bf16.mxu0 0
      %892 = vmatpush1.bf16.msra.mxu0 0
      %893 = vmatprep.subr.bf16.mxu0 0
      %894 = vmatpush1.bf16.msra.mxu0 0
      %895 = vmatprep.subr.bf16.mxu0 0
      %896 = vmatpush1.bf16.msra.mxu0 0
      %897 = vmatprep.subr.bf16.mxu0 0
      %898 = vmatpush1.bf16.msra.mxu0 0
      %899 = vmatprep.subr.bf16.mxu0 0
      %900 = vmatpush1.bf16.msra.mxu0 0
      %901 = vmatprep.subr.bf16.mxu0 0
      %902 = vmatpush1.bf16.msra.mxu0 0
      %903 = vmatprep.subr.bf16.mxu0 0
      %904 = vmatpush1.bf16.msra.mxu0 0
      %905 = vmatprep.subr.bf16.mxu0 0
      %906 = vmatpush1.bf16.msra.mxu0 0
      %907 = vmatprep.subr.bf16.mxu0 0
      %908 = vmatpush1.bf16.msra.mxu0 0
      %909 = vmatprep.subr.bf16.mxu0 0
      %910 = vmatpush1.bf16.msra.mxu0 0
      %911 = vmatprep.subr.bf16.mxu0 0
      %912 = vmatpush1.bf16.msra.mxu0 0
      %913 = vmatprep.subr.bf16.mxu0 0
      %914 = vmatpush1.bf16.msra.mxu0 0
      %915 = vmatprep.subr.bf16.mxu0 0
      %916 = vmatpush1.bf16.msra.mxu0 0
      %917 = vmatprep.mubr.bf16.mxu0 0
      %918 = vmatmul.mubr.bf16.gmra.mrb[0].mxu0 %v880
      %v919 = vpop.f32.mrb[0].mxu0
      %v920 = vadd.f32 %v869, %v919
      %v921 = vpop.f32.mrb[0].mxu0
      %v922 = vpop.f32.mrb[0].mxu0
      %v923 = vpop.f32.mrb[0].mxu0
      %924 = vdwg.mxu0
      %925 = vrot.lane.b32.xlu0 %v624, 112
      %v926 = vpop.permute.xlu0 %925
      %v928 = vsel %vm299, %v926, 0
      %930 = vmatprep.subr.bf16.mxu0 0
      %931 = vmatpush1.bf16.msra.mxu0 %v305
      %932 = vmatprep.subr.bf16.mxu0 0
      %933 = vmatpush1.bf16.msra.mxu0 0
      %934 = vmatprep.subr.bf16.mxu0 0
      %935 = vmatpush1.bf16.msra.mxu0 0
      %936 = vmatprep.subr.bf16.mxu0 0
      %937 = vmatpush1.bf16.msra.mxu0 0
      %938 = vmatprep.subr.bf16.mxu0 0
      %939 = vmatpush1.bf16.msra.mxu0 0
      %940 = vmatprep.subr.bf16.mxu0 0
      %941 = vmatpush1.bf16.msra.mxu0 0
      %942 = vmatprep.subr.bf16.mxu0 0
      %943 = vmatpush1.bf16.msra.mxu0 0
      %944 = vmatprep.subr.bf16.mxu0 0
      %945 = vmatpush1.bf16.msra.mxu0 0
      %946 = vmatprep.subr.bf16.mxu0 0
      %947 = vmatpush1.bf16.msra.mxu0 0
      %948 = vmatprep.subr.bf16.mxu0 0
      %949 = vmatpush1.bf16.msra.mxu0 0
      %950 = vmatprep.subr.bf16.mxu0 0
      %951 = vmatpush1.bf16.msra.mxu0 0
      %952 = vmatprep.subr.bf16.mxu0 0
      %953 = vmatpush1.bf16.msra.mxu0 0
      %954 = vmatprep.subr.bf16.mxu0 0
      %955 = vmatpush1.bf16.msra.mxu0 0
      %956 = vmatprep.subr.bf16.mxu0 0
      %957 = vmatpush1.bf16.msra.mxu0 0
      %958 = vmatprep.subr.bf16.mxu0 0
      %959 = vmatpush1.bf16.msra.mxu0 0
      %960 = vmatprep.subr.bf16.mxu0 0
      %961 = vmatpush1.bf16.msra.mxu0 0
      %962 = vmatprep.mubr.bf16.mxu0 0
      %963 = vmatmul.mubr.bf16.gmra.mrb[0].mxu0 %v928
      %v964 = vpop.f32.mrb[0].mxu0
      %v965 = vadd.f32 0.0, %v964
      %v966 = vpop.f32.mrb[0].mxu0
      %v967 = vpop.f32.mrb[0].mxu0
      %v968 = vpop.f32.mrb[0].mxu0
      %969 = vdwg.mxu0
      %971 = vset.pattern.permute.xlu0 0
      %972 = vperm.xlu0 %971, %v965
      %v973 = vpop.permute.xlu0 %972
      %v975 = vsel %vm347, %v973, 0.0
      %976 = vset.pattern.permute.xlu0 1
      %977 = vperm.xlu0 %976, %v965
      %v978 = vpop.permute.xlu0 %977
      %v980 = vsel %vm354, %v978, %v975
      %981 = vset.pattern.permute.xlu0 2
      %982 = vperm.xlu0 %981, %v965
      %v983 = vpop.permute.xlu0 %982
      %v985 = vsel %vm360, %v983, %v980
      %986 = vset.pattern.permute.xlu0 3
      %987 = vperm.xlu0 %986, %v965
      %v988 = vpop.permute.xlu0 %987
      %v990 = vsel %vm366, %v988, %v985
      %991 = vset.pattern.permute.xlu0 4
      %992 = vperm.xlu0 %991, %v965
      %v993 = vpop.permute.xlu0 %992
      %v995 = vsel %vm372, %v993, %v990
      %996 = vset.pattern.permute.xlu0 5
      %997 = vperm.xlu0 %996, %v965
      %v998 = vpop.permute.xlu0 %997
      %v1000 = vsel %vm378, %v998, %v995
      %1001 = vset.pattern.permute.xlu0 6
      %1002 = vperm.xlu0 %1001, %v965
      %v1003 = vpop.permute.xlu0 %1002
      %v1005 = vsel %vm384, %v1003, %v1000
      %1006 = vset.pattern.permute.xlu0 7
      %1007 = vperm.xlu0 %1006, %v965
      %v1008 = vpop.permute.xlu0 %1007
      %v1010 = vsel %vm390, %v1008, %v1005
      %1011 = vset.pattern.permute.xlu0 8
      %1012 = vperm.xlu0 %1011, %v965
      %v1013 = vpop.permute.xlu0 %1012
      %v1015 = vsel %vm396, %v1013, %v1010
      %1016 = vrot.lane.b32.xlu0 %v718, 112
      %v1017 = vpop.permute.xlu0 %1016
      %v1019 = vsel %vm299, %v1017, 0
      %1021 = vmatprep.subr.bf16.mxu0 0
      %1022 = vmatpush1.bf16.xpose.msra.mxu0 %v1019
      %1023 = vmatprep.subr.bf16.mxu0 0
      %1024 = vmatpush1.bf16.xpose.msra.mxu0 0
      %1025 = vmatprep.subr.bf16.mxu0 0
      %1026 = vmatpush1.bf16.xpose.msra.mxu0 0
      %1027 = vmatprep.subr.bf16.mxu0 0
      %1028 = vmatpush1.bf16.xpose.msra.mxu0 0
      %1029 = vmatprep.subr.bf16.mxu0 0
      %1030 = vmatpush1.bf16.xpose.msra.mxu0 0
      %1031 = vmatprep.subr.bf16.mxu0 0
      %1032 = vmatpush1.bf16.xpose.msra.mxu0 0
      %1033 = vmatprep.subr.bf16.mxu0 0
      %1034 = vmatpush1.bf16.xpose.msra.mxu0 0
      %1035 = vmatprep.subr.bf16.mxu0 0
      %1036 = vmatpush1.bf16.xpose.msra.mxu0 0
      %1037 = vmatprep.subr.bf16.mxu0 0
      %1038 = vmatpush1.bf16.xpose.msra.mxu0 0
      %1039 = vmatprep.subr.bf16.mxu0 0
      %1040 = vmatpush1.bf16.xpose.msra.mxu0 0
      %1041 = vmatprep.subr.bf16.mxu0 0
      %1042 = vmatpush1.bf16.xpose.msra.mxu0 0
      %1043 = vmatprep.subr.bf16.mxu0 0
      %1044 = vmatpush1.bf16.xpose.msra.mxu0 0
      %1045 = vmatprep.subr.bf16.mxu0 0
      %1046 = vmatpush1.bf16.xpose.msra.mxu0 0
      %1047 = vmatprep.subr.bf16.mxu0 0
      %1048 = vmatpush1.bf16.xpose.msra.mxu0 0
      %1049 = vmatprep.subr.bf16.mxu0 0
      %1050 = vmatpush1.bf16.xpose.msra.mxu0 0
      %1051 = vmatprep.subr.bf16.mxu0 0
      %1052 = vmatpush1.bf16.xpose.msra.mxu0 0
      %1053 = vmatprep.mubr.bf16.mxu0 0
      %1054 = vmatmul.mubr.bf16.gmra.mrb[0].mxu0 %v928
      %v1055 = vpop.f32.mrb[0].mxu0
      %v1056 = vadd.f32 %v1015, %v1055
      %v1057 = vpop.f32.mrb[0].mxu0
      %v1058 = vpop.f32.mrb[0].mxu0
      %v1059 = vpop.f32.mrb[0].mxu0
      %1060 = vdwg.mxu0
      %v1061 = vlaneseq
      %v1062 = vshrl.u32 %v1061, 7
      %v1063 = vsub.s32 2, %v1062
      %v1064 = vrot.slane %v285, %v1063
      %v1065 = vadd.f32 %v1056, %v1064
      %v1066 = vsel %vm299, %v1065, -inf
      %1067 = vmax.xlane.f32.xlu0 %v1066
      %v1068 = vpop.xlane.xlu0 %1067
      %v1069 = vsub.f32 %v1065, %v1068
      %v1070 = vmul.f32 %v1069, 1.442695
      %v1071 = vpow.pop %v1070
      %v1072 = vsel %vm299, %v1071, 0.0
      %1073 = vadd.xlane.f32.xlu0 %v1072
      %v1074 = vpop.xlane.xlu0 %1073
      %v1075 = vrcp.pop %v1074
      %v1076 = vmul.f32 %v1071, %v1075
      %v1077 = vlaneseq
      %v1078 = vshrl.u32 %v1077, 7
      %v1079 = vsub.s32 2, %v1078
      %v1080 = vrot.slane %v462, %v1079
      %v1081 = vmul.f32 %v1076, %v1080
      %v1082 = vpack.c.bf16 %v1081, %v1081
      %v1083 = vsel %vm347, %v1081, 0.0
      %v1084 = vsel %vm299, %v1083, 0.0
      %1085 = vadd.xlane.f32.xlu0 %v1084
      %v1086 = vpop.xlane.xlu0 %1085
      %v1087 = vsel %vm354, %v1081, 0.0
      %v1088 = vsel %vm299, %v1087, 0.0
      %1089 = vadd.xlane.f32.xlu0 %v1088
      %v1090 = vpop.xlane.xlu0 %1089
      %v1091 = vsel %vm360, %v1081, 0.0
      %v1092 = vsel %vm299, %v1091, 0.0
      %1093 = vadd.xlane.f32.xlu0 %v1092
      %v1094 = vpop.xlane.xlu0 %1093
      %v1095 = vsel %vm366, %v1081, 0.0
      %v1096 = vsel %vm299, %v1095, 0.0
      %1097 = vadd.xlane.f32.xlu0 %v1096
      %v1098 = vpop.xlane.xlu0 %1097
      %v1099 = vsel %vm372, %v1081, 0.0
      %v1100 = vsel %vm299, %v1099, 0.0
      %1101 = vadd.xlane.f32.xlu0 %v1100
      %v1102 = vpop.xlane.xlu0 %1101
      %v1103 = vsel %vm378, %v1081, 0.0
      %v1104 = vsel %vm299, %v1103, 0.0
      %1105 = vadd.xlane.f32.xlu0 %v1104
      %v1106 = vpop.xlane.xlu0 %1105
      %v1107 = vsel %vm384, %v1081, 0.0
      %v1108 = vsel %vm299, %v1107, 0.0
      %1109 = vadd.xlane.f32.xlu0 %v1108
      %v1110 = vpop.xlane.xlu0 %1109
      %v1111 = vsel %vm390, %v1081, 0.0
      %v1112 = vsel %vm299, %v1111, 0.0
      %1113 = vadd.xlane.f32.xlu0 %v1112
      %v1114 = vpop.xlane.xlu0 %1113
      %v1115 = vsel %vm396, %v1081, 0.0
      %v1116 = vsel %vm299, %v1115, 0.0
      %1117 = vadd.xlane.f32.xlu0 %v1116
      %v1118 = vpop.xlane.xlu0 %1117
      %v1119 = vsel %vm505, %v1086, %v1090
      %v1120 = vsel %vm507, %v1119, %v1094
      %v1121 = vsel %vm509, %v1120, %v1098
      %v1122 = vsel %vm511, %v1121, %v1102
      %v1123 = vsel %vm513, %v1122, %v1106
      %v1124 = vsel %vm515, %v1123, %v1110
      %v1125 = vsel %vm517, %v1124, %v1114
      %v1126 = vsel %vm299, %v1125, %v1118
      %v1127 = vpack.c.bf16 %v1126, %v1126
      %v1129 = vsel %vm526, %v1127, 0
      %1131 = vmatprep.subr.bf16.mxu0 0
      %1132 = vmatpush1.bf16.msra.mxu0 %v534
      %1133 = vmatprep.subr.bf16.mxu0 0
      %1134 = vmatpush1.bf16.msra.mxu0 0
      %1135 = vmatprep.subr.bf16.mxu0 0
      %1136 = vmatpush1.bf16.msra.mxu0 0
      %1137 = vmatprep.subr.bf16.mxu0 0
      %1138 = vmatpush1.bf16.msra.mxu0 0
      %1139 = vmatprep.subr.bf16.mxu0 0
      %1140 = vmatpush1.bf16.msra.mxu0 0
      %1141 = vmatprep.subr.bf16.mxu0 0
      %1142 = vmatpush1.bf16.msra.mxu0 0
      %1143 = vmatprep.subr.bf16.mxu0 0
      %1144 = vmatpush1.bf16.msra.mxu0 0
      %1145 = vmatprep.subr.bf16.mxu0 0
      %1146 = vmatpush1.bf16.msra.mxu0 0
      %1147 = vmatprep.subr.bf16.mxu0 0
      %1148 = vmatpush1.bf16.msra.mxu0 0
      %1149 = vmatprep.subr.bf16.mxu0 0
      %1150 = vmatpush1.bf16.msra.mxu0 0
      %1151 = vmatprep.subr.bf16.mxu0 0
      %1152 = vmatpush1.bf16.msra.mxu0 0
      %1153 = vmatprep.subr.bf16.mxu0 0
      %1154 = vmatpush1.bf16.msra.mxu0 0
      %1155 = vmatprep.subr.bf16.mxu0 0
      %1156 = vmatpush1.bf16.msra.mxu0 0
      %1157 = vmatprep.subr.bf16.mxu0 0
      %1158 = vmatpush1.bf16.msra.mxu0 0
      %1159 = vmatprep.subr.bf16.mxu0 0
      %1160 = vmatpush1.bf16.msra.mxu0 0
      %1161 = vmatprep.subr.bf16.mxu0 0
      %1162 = vmatpush1.bf16.msra.mxu0 0
      %1163 = vmatprep.mubr.bf16.mxu0 0
      %1164 = vmatmul.mubr.bf16.gmra.mrb[0].mxu0 %v1129
      %v1165 = vpop.f32.mrb[0].mxu0
      %v1166 = vadd.f32 0.0, %v1165
      %v1167 = vpop.f32.mrb[0].mxu0
      %v1168 = vpop.f32.mrb[0].mxu0
      %v1169 = vpop.f32.mrb[0].mxu0
      %1170 = vdwg.mxu0
      %1171 = vrot.lane.b32.xlu0 %v876, 112
      %v1172 = vpop.permute.xlu0 %1171
      %v1174 = vsel %vm299, %v1082, 0
      %v1177 = vsel %vm303, %v1172, 0
      %1179 = vmatprep.subr.bf16.mxu0 0
      %1180 = vmatpush1.bf16.msra.mxu0 %v1177
      %1181 = vmatprep.subr.bf16.mxu0 0
      %1182 = vmatpush1.bf16.msra.mxu0 0
      %1183 = vmatprep.subr.bf16.mxu0 0
      %1184 = vmatpush1.bf16.msra.mxu0 0
      %1185 = vmatprep.subr.bf16.mxu0 0
      %1186 = vmatpush1.bf16.msra.mxu0 0
      %1187 = vmatprep.subr.bf16.mxu0 0
      %1188 = vmatpush1.bf16.msra.mxu0 0
      %1189 = vmatprep.subr.bf16.mxu0 0
      %1190 = vmatpush1.bf16.msra.mxu0 0
      %1191 = vmatprep.subr.bf16.mxu0 0
      %1192 = vmatpush1.bf16.msra.mxu0 0
      %1193 = vmatprep.subr.bf16.mxu0 0
      %1194 = vmatpush1.bf16.msra.mxu0 0
      %1195 = vmatprep.subr.bf16.mxu0 0
      %1196 = vmatpush1.bf16.msra.mxu0 0
      %1197 = vmatprep.subr.bf16.mxu0 0
      %1198 = vmatpush1.bf16.msra.mxu0 0
      %1199 = vmatprep.subr.bf16.mxu0 0
      %1200 = vmatpush1.bf16.msra.mxu0 0
      %1201 = vmatprep.subr.bf16.mxu0 0
      %1202 = vmatpush1.bf16.msra.mxu0 0
      %1203 = vmatprep.subr.bf16.mxu0 0
      %1204 = vmatpush1.bf16.msra.mxu0 0
      %1205 = vmatprep.subr.bf16.mxu0 0
      %1206 = vmatpush1.bf16.msra.mxu0 0
      %1207 = vmatprep.subr.bf16.mxu0 0
      %1208 = vmatpush1.bf16.msra.mxu0 0
      %1209 = vmatprep.subr.bf16.mxu0 0
      %1210 = vmatpush1.bf16.msra.mxu0 0
      %1211 = vmatprep.mubr.bf16.mxu0 0
      %1212 = vmatmul.mubr.bf16.gmra.mrb[0].mxu0 %v1174
      %v1213 = vpop.f32.mrb[0].mxu0
      %v1214 = vadd.f32 %v1166, %v1213
      %v1215 = vpop.f32.mrb[0].mxu0
      %v1216 = vpop.f32.mrb[0].mxu0
      %v1217 = vpop.f32.mrb[0].mxu0
      %1218 = vdwg.mxu0
      %1219 = vrot.lane.b32.xlu0 %v624, 104
      %v1220 = vpop.permute.xlu0 %1219
      %v1222 = vsel %vm299, %v1220, 0
      %1224 = vmatprep.subr.bf16.mxu0 0
      %1225 = vmatpush1.bf16.msra.mxu0 %v305
      %1226 = vmatprep.subr.bf16.mxu0 0
      %1227 = vmatpush1.bf16.msra.mxu0 0
      %1228 = vmatprep.subr.bf16.mxu0 0
      %1229 = vmatpush1.bf16.msra.mxu0 0
      %1230 = vmatprep.subr.bf16.mxu0 0
      %1231 = vmatpush1.bf16.msra.mxu0 0
      %1232 = vmatprep.subr.bf16.mxu0 0
      %1233 = vmatpush1.bf16.msra.mxu0 0
      %1234 = vmatprep.subr.bf16.mxu0 0
      %1235 = vmatpush1.bf16.msra.mxu0 0
      %1236 = vmatprep.subr.bf16.mxu0 0
      %1237 = vmatpush1.bf16.msra.mxu0 0
      %1238 = vmatprep.subr.bf16.mxu0 0
      %1239 = vmatpush1.bf16.msra.mxu0 0
      %1240 = vmatprep.subr.bf16.mxu0 0
      %1241 = vmatpush1.bf16.msra.mxu0 0
      %1242 = vmatprep.subr.bf16.mxu0 0
      %1243 = vmatpush1.bf16.msra.mxu0 0
      %1244 = vmatprep.subr.bf16.mxu0 0
      %1245 = vmatpush1.bf16.msra.mxu0 0
      %1246 = vmatprep.subr.bf16.mxu0 0
      %1247 = vmatpush1.bf16.msra.mxu0 0
      %1248 = vmatprep.subr.bf16.mxu0 0
      %1249 = vmatpush1.bf16.msra.mxu0 0
      %1250 = vmatprep.subr.bf16.mxu0 0
      %1251 = vmatpush1.bf16.msra.mxu0 0
      %1252 = vmatprep.subr.bf16.mxu0 0
      %1253 = vmatpush1.bf16.msra.mxu0 0
      %1254 = vmatprep.subr.bf16.mxu0 0
      %1255 = vmatpush1.bf16.msra.mxu0 0
      %1256 = vmatprep.mubr.bf16.mxu0 0
      %1257 = vmatmul.mubr.bf16.gmra.mrb[0].mxu0 %v1222
      %v1258 = vpop.f32.mrb[0].mxu0
      %v1259 = vadd.f32 0.0, %v1258
      %v1260 = vpop.f32.mrb[0].mxu0
      %v1261 = vpop.f32.mrb[0].mxu0
      %v1262 = vpop.f32.mrb[0].mxu0
      %1263 = vdwg.mxu0
      %1265 = vset.pattern.permute.xlu0 0
      %1266 = vperm.xlu0 %1265, %v1259
      %v1267 = vpop.permute.xlu0 %1266
      %v1269 = vsel %vm347, %v1267, 0.0
      %1270 = vset.pattern.permute.xlu0 1
      %1271 = vperm.xlu0 %1270, %v1259
      %v1272 = vpop.permute.xlu0 %1271
      %v1274 = vsel %vm354, %v1272, %v1269
      %1275 = vset.pattern.permute.xlu0 2
      %1276 = vperm.xlu0 %1275, %v1259
      %v1277 = vpop.permute.xlu0 %1276
      %v1279 = vsel %vm360, %v1277, %v1274
      %1280 = vset.pattern.permute.xlu0 3
      %1281 = vperm.xlu0 %1280, %v1259
      %v1282 = vpop.permute.xlu0 %1281
      %v1284 = vsel %vm366, %v1282, %v1279
      %1285 = vset.pattern.permute.xlu0 4
      %1286 = vperm.xlu0 %1285, %v1259
      %v1287 = vpop.permute.xlu0 %1286
      %v1289 = vsel %vm372, %v1287, %v1284
      %1290 = vset.pattern.permute.xlu0 5
      %1291 = vperm.xlu0 %1290, %v1259
      %v1292 = vpop.permute.xlu0 %1291
      %v1294 = vsel %vm378, %v1292, %v1289
      %1295 = vset.pattern.permute.xlu0 6
      %1296 = vperm.xlu0 %1295, %v1259
      %v1297 = vpop.permute.xlu0 %1296
      %v1299 = vsel %vm384, %v1297, %v1294
      %1300 = vset.pattern.permute.xlu0 7
      %1301 = vperm.xlu0 %1300, %v1259
      %v1302 = vpop.permute.xlu0 %1301
      %v1304 = vsel %vm390, %v1302, %v1299
      %1305 = vset.pattern.permute.xlu0 8
      %1306 = vperm.xlu0 %1305, %v1259
      %v1307 = vpop.permute.xlu0 %1306
      %v1309 = vsel %vm396, %v1307, %v1304
      %1310 = vrot.lane.b32.xlu0 %v718, 104
      %v1311 = vpop.permute.xlu0 %1310
      %v1313 = vsel %vm299, %v1311, 0
      %1315 = vmatprep.subr.bf16.mxu0 0
      %1316 = vmatpush1.bf16.xpose.msra.mxu0 %v1313
      %1317 = vmatprep.subr.bf16.mxu0 0
      %1318 = vmatpush1.bf16.xpose.msra.mxu0 0
      %1319 = vmatprep.subr.bf16.mxu0 0
      %1320 = vmatpush1.bf16.xpose.msra.mxu0 0
      %1321 = vmatprep.subr.bf16.mxu0 0
      %1322 = vmatpush1.bf16.xpose.msra.mxu0 0
      %1323 = vmatprep.subr.bf16.mxu0 0
      %1324 = vmatpush1.bf16.xpose.msra.mxu0 0
      %1325 = vmatprep.subr.bf16.mxu0 0
      %1326 = vmatpush1.bf16.xpose.msra.mxu0 0
      %1327 = vmatprep.subr.bf16.mxu0 0
      %1328 = vmatpush1.bf16.xpose.msra.mxu0 0
      %1329 = vmatprep.subr.bf16.mxu0 0
      %1330 = vmatpush1.bf16.xpose.msra.mxu0 0
      %1331 = vmatprep.subr.bf16.mxu0 0
      %1332 = vmatpush1.bf16.xpose.msra.mxu0 0
      %1333 = vmatprep.subr.bf16.mxu0 0
      %1334 = vmatpush1.bf16.xpose.msra.mxu0 0
      %1335 = vmatprep.subr.bf16.mxu0 0
      %1336 = vmatpush1.bf16.xpose.msra.mxu0 0
      %1337 = vmatprep.subr.bf16.mxu0 0
      %1338 = vmatpush1.bf16.xpose.msra.mxu0 0
      %1339 = vmatprep.subr.bf16.mxu0 0
      %1340 = vmatpush1.bf16.xpose.msra.mxu0 0
      %1341 = vmatprep.subr.bf16.mxu0 0
      %1342 = vmatpush1.bf16.xpose.msra.mxu0 0
      %1343 = vmatprep.subr.bf16.mxu0 0
      %1344 = vmatpush1.bf16.xpose.msra.mxu0 0
      %1345 = vmatprep.subr.bf16.mxu0 0
      %1346 = vmatpush1.bf16.xpose.msra.mxu0 0
      %1347 = vmatprep.mubr.bf16.mxu0 0
      %1348 = vmatmul.mubr.bf16.gmra.mrb[0].mxu0 %v1222
      %v1349 = vpop.f32.mrb[0].mxu0
      %v1350 = vadd.f32 %v1309, %v1349
      %v1351 = vpop.f32.mrb[0].mxu0
      %v1352 = vpop.f32.mrb[0].mxu0
      %v1353 = vpop.f32.mrb[0].mxu0
      %1354 = vdwg.mxu0
      %v1355 = vlaneseq
      %v1356 = vshrl.u32 %v1355, 7
      %v1357 = vsub.s32 3, %v1356
      %v1358 = vrot.slane %v285, %v1357
      %v1359 = vadd.f32 %v1350, %v1358
      %v1360 = vsel %vm299, %v1359, -inf
      %1361 = vmax.xlane.f32.xlu0 %v1360
      %v1362 = vpop.xlane.xlu0 %1361
      %v1363 = vsub.f32 %v1359, %v1362
      %v1364 = vmul.f32 %v1363, 1.442695
      %v1365 = vpow.pop %v1364
      %v1366 = vsel %vm299, %v1365, 0.0
      %1367 = vadd.xlane.f32.xlu0 %v1366
      %v1368 = vpop.xlane.xlu0 %1367
      %v1369 = vrcp.pop %v1368
      %v1370 = vmul.f32 %v1365, %v1369
      %v1371 = vlaneseq
      %v1372 = vshrl.u32 %v1371, 7
      %v1373 = vsub.s32 3, %v1372
      %v1374 = vrot.slane %v462, %v1373
      %v1375 = vmul.f32 %v1370, %v1374
      %v1376 = vpack.c.bf16 %v1375, %v1375
      %v1377 = vsel %vm347, %v1375, 0.0
      %v1378 = vsel %vm299, %v1377, 0.0
      %1379 = vadd.xlane.f32.xlu0 %v1378
      %v1380 = vpop.xlane.xlu0 %1379
      %v1381 = vsel %vm354, %v1375, 0.0
      %v1382 = vsel %vm299, %v1381, 0.0
      %1383 = vadd.xlane.f32.xlu0 %v1382
      %v1384 = vpop.xlane.xlu0 %1383
      %v1385 = vsel %vm360, %v1375, 0.0
      %v1386 = vsel %vm299, %v1385, 0.0
      %1387 = vadd.xlane.f32.xlu0 %v1386
      %v1388 = vpop.xlane.xlu0 %1387
      %v1389 = vsel %vm366, %v1375, 0.0
      %v1390 = vsel %vm299, %v1389, 0.0
      %1391 = vadd.xlane.f32.xlu0 %v1390
      %v1392 = vpop.xlane.xlu0 %1391
      %v1393 = vsel %vm372, %v1375, 0.0
      %v1394 = vsel %vm299, %v1393, 0.0
      %1395 = vadd.xlane.f32.xlu0 %v1394
      %v1396 = vpop.xlane.xlu0 %1395
      %v1397 = vsel %vm378, %v1375, 0.0
      %v1398 = vsel %vm299, %v1397, 0.0
      %1399 = vadd.xlane.f32.xlu0 %v1398
      %v1400 = vpop.xlane.xlu0 %1399
      %v1401 = vsel %vm384, %v1375, 0.0
      %v1402 = vsel %vm299, %v1401, 0.0
      %1403 = vadd.xlane.f32.xlu0 %v1402
      %v1404 = vpop.xlane.xlu0 %1403
      %v1405 = vsel %vm390, %v1375, 0.0
      %v1406 = vsel %vm299, %v1405, 0.0
      %1407 = vadd.xlane.f32.xlu0 %v1406
      %v1408 = vpop.xlane.xlu0 %1407
      %v1409 = vsel %vm396, %v1375, 0.0
      %v1410 = vsel %vm299, %v1409, 0.0
      %1411 = vadd.xlane.f32.xlu0 %v1410
      %v1412 = vpop.xlane.xlu0 %1411
      %v1413 = vsel %vm505, %v1380, %v1384
      %v1414 = vsel %vm507, %v1413, %v1388
      %v1415 = vsel %vm509, %v1414, %v1392
      %v1416 = vsel %vm511, %v1415, %v1396
      %v1417 = vsel %vm513, %v1416, %v1400
      %v1418 = vsel %vm515, %v1417, %v1404
      %v1419 = vsel %vm517, %v1418, %v1408
      %v1420 = vsel %vm299, %v1419, %v1412
      %v1421 = vpack.c.bf16 %v1420, %v1420
      %v1423 = vsel %vm526, %v1421, 0
      %1425 = vmatprep.subr.bf16.mxu0 0
      %1426 = vmatpush1.bf16.msra.mxu0 %v534
      %1427 = vmatprep.subr.bf16.mxu0 0
      %1428 = vmatpush1.bf16.msra.mxu0 0
      %1429 = vmatprep.subr.bf16.mxu0 0
      %1430 = vmatpush1.bf16.msra.mxu0 0
      %1431 = vmatprep.subr.bf16.mxu0 0
      %1432 = vmatpush1.bf16.msra.mxu0 0
      %1433 = vmatprep.subr.bf16.mxu0 0
      %1434 = vmatpush1.bf16.msra.mxu0 0
      %1435 = vmatprep.subr.bf16.mxu0 0
      %1436 = vmatpush1.bf16.msra.mxu0 0
      %1437 = vmatprep.subr.bf16.mxu0 0
      %1438 = vmatpush1.bf16.msra.mxu0 0
      %1439 = vmatprep.subr.bf16.mxu0 0
      %1440 = vmatpush1.bf16.msra.mxu0 0
      %1441 = vmatprep.subr.bf16.mxu0 0
      %1442 = vmatpush1.bf16.msra.mxu0 0
      %1443 = vmatprep.subr.bf16.mxu0 0
      %1444 = vmatpush1.bf16.msra.mxu0 0
      %1445 = vmatprep.subr.bf16.mxu0 0
      %1446 = vmatpush1.bf16.msra.mxu0 0
      %1447 = vmatprep.subr.bf16.mxu0 0
      %1448 = vmatpush1.bf16.msra.mxu0 0
      %1449 = vmatprep.subr.bf16.mxu0 0
      %1450 = vmatpush1.bf16.msra.mxu0 0
      %1451 = vmatprep.subr.bf16.mxu0 0
      %1452 = vmatpush1.bf16.msra.mxu0 0
      %1453 = vmatprep.subr.bf16.mxu0 0
      %1454 = vmatpush1.bf16.msra.mxu0 0
      %1455 = vmatprep.subr.bf16.mxu0 0
      %1456 = vmatpush1.bf16.msra.mxu0 0
      %1457 = vmatprep.mubr.bf16.mxu0 0
      %1458 = vmatmul.mubr.bf16.gmra.mrb[0].mxu0 %v1423
      %v1459 = vpop.f32.mrb[0].mxu0
      %v1460 = vadd.f32 0.0, %v1459
      %v1461 = vpop.f32.mrb[0].mxu0
      %v1462 = vpop.f32.mrb[0].mxu0
      %v1463 = vpop.f32.mrb[0].mxu0
      %1464 = vdwg.mxu0
      %1465 = vrot.lane.b32.xlu0 %v876, 104
      %v1466 = vpop.permute.xlu0 %1465
      %v1468 = vsel %vm299, %v1376, 0
      %v1471 = vsel %vm303, %v1466, 0
      %1473 = vmatprep.subr.bf16.mxu0 0
      %1474 = vmatpush1.bf16.msra.mxu0 %v1471
      %1475 = vmatprep.subr.bf16.mxu0 0
      %1476 = vmatpush1.bf16.msra.mxu0 0
      %1477 = vmatprep.subr.bf16.mxu0 0
      %1478 = vmatpush1.bf16.msra.mxu0 0
      %1479 = vmatprep.subr.bf16.mxu0 0
      %1480 = vmatpush1.bf16.msra.mxu0 0
      %1481 = vmatprep.subr.bf16.mxu0 0
      %1482 = vmatpush1.bf16.msra.mxu0 0
      %1483 = vmatprep.subr.bf16.mxu0 0
      %1484 = vmatpush1.bf16.msra.mxu0 0
      %1485 = vmatprep.subr.bf16.mxu0 0
      %1486 = vmatpush1.bf16.msra.mxu0 0
      %1487 = vmatprep.subr.bf16.mxu0 0
      %1488 = vmatpush1.bf16.msra.mxu0 0
      %1489 = vmatprep.subr.bf16.mxu0 0
      %1490 = vmatpush1.bf16.msra.mxu0 0
      %1491 = vmatprep.subr.bf16.mxu0 0
      %1492 = vmatpush1.bf16.msra.mxu0 0
      %1493 = vmatprep.subr.bf16.mxu0 0
      %1494 = vmatpush1.bf16.msra.mxu0 0
      %1495 = vmatprep.subr.bf16.mxu0 0
      %1496 = vmatpush1.bf16.msra.mxu0 0
      %1497 = vmatprep.subr.bf16.mxu0 0
      %1498 = vmatpush1.bf16.msra.mxu0 0
      %1499 = vmatprep.subr.bf16.mxu0 0
      %1500 = vmatpush1.bf16.msra.mxu0 0
      %1501 = vmatprep.subr.bf16.mxu0 0
      %1502 = vmatpush1.bf16.msra.mxu0 0
      %1503 = vmatprep.subr.bf16.mxu0 0
      %1504 = vmatpush1.bf16.msra.mxu0 0
      %1505 = vmatprep.mubr.bf16.mxu0 0
      %1506 = vmatmul.mubr.bf16.gmra.mrb[0].mxu0 %v1468
      %v1507 = vpop.f32.mrb[0].mxu0
      %v1508 = vadd.f32 %v1460, %v1507
      %v1509 = vpop.f32.mrb[0].mxu0
      %v1510 = vpop.f32.mrb[0].mxu0
      %v1511 = vpop.f32.mrb[0].mxu0
      %1512 = vdwg.mxu0
      %1514 = vrot.lane.b32.xlu0 %v920, 8
      %v1515 = vpop.permute.xlu0 %1514
      %1518 = vrot.lane.b32.xlu0 %v1214, 16
      %v1519 = vpop.permute.xlu0 %1518
      %1522 = vrot.lane.b32.xlu0 %v1508, 24
      %v1523 = vpop.permute.xlu0 %1522
      %v1525 = vsel %vm299, %v617, %v1515
      %vm1526 = vcmask 130048
      %v1527 = vsel %vm1526, %v1525, %v1519
      %vm1528 = vcmask 195584
      %v1529 = vsel %vm1528, %v1527, %v1523
      %v1530 = vpack.c.bf16 %v1529, %v1529
      %vm1531 = vcmask 257024
      %1532 = vst.msk [vmem:[%s280] sm:$0xf] %vm1531, %v1530
      %p1533 = scmp.lt.s32.totalorder %s17, 3
      %s1534 = scalar_select %p1533, %s17, 3
      %s1535 = smul.addr %s1534, 4
      %s1536 = scalar_lea.vmem %s6, %s1535
      // Predicated region
      $region45: #{tradition_mha_relative.1} parent=43 // pred_check
        %p1537 = pneg %p176
      $region46: #{tradition_mha_relative.1} parent=43 // pred_check_branch
        %1539 = sbr.rel (%p1537) target = $region48
      $region47: #{tradition_mha_relative.1} parent=43 // pred_region
        _
      $region48: #{tradition_mha_relative.1} parent=43 // pred_fallthru
        _
    $region44: #{tradition_mha_relative.1} parent=5 // pred_fallthru
      _
    %p1540 = scmp.le.s32.totalorder 2, %s12
    // Predicated region
    $region49: #{tradition_mha_relative.1} parent=5 // pred_check
      %p1541 = pneg %p1540
    $region50: #{tradition_mha_relative.1} parent=5 // pred_check_branch
      %1543 = sbr.rel (%p1541) target = $region52
    $region51: #{tradition_mha_relative.1} parent=5 // pred_region
      %s1544 = ssub.s32 %s12, 2
      // Predicated region
      $region53: #{tradition_mha_relative.1} parent=51 // pred_check
        %p1545 = pneg %p182
      $region54: #{tradition_mha_relative.1} parent=51 // pred_check_branch
        %1547 = sbr.rel (%p1545) target = $region56
      $region55: #{tradition_mha_relative.1} parent=51 // pred_region
        %p1548 = scmp.lt.s32.totalorder %s18, 3
        %s1549 = scalar_select %p1548, %s18, 3
        %s1550 = smul.addr %s1549, 4
        %s1551 = scalar_lea.vmem %s6, %s1550
      $region56: #{tradition_mha_relative.1} parent=51 // pred_fallthru
        _
    $region52: #{tradition_mha_relative.1} parent=5 // pred_fallthru
      _
  $region6: #{tradition_mha_relative.1} parent=0 // loop_footer
    %s16 = sadd.s32 1, %s12
  $region7: #{tradition_mha_relative.1} parent=0 // loop_footer_branch
    %11 = sbr.rel target = $region3
  $region8: #{tradition_mha_relative.1} parent=0 // loop_exit
    _

</llo_original>
